<compile_context>
chip_gen: v5e
topology: v5e:2x2
jax: 0.10.0
libtpu: 0.0.40
codegen_flags: <defaults>
</compile_context>

<pallas_src>
import math
import functools

import jax
import jax.numpy as jnp
from jax.experimental import pallas as pl
from jax.experimental.pallas import tpu as pltpu


def _mha_kernel(x_ref, wq_ref, bq_ref, wk_ref, bk_ref, wv_ref, bv_ref,
                adj_ref, sp_ref, out_ref, attn_ref=None, *,
                n_heads, dk, n_n, b_tile):
    cdt = x_ref.dtype          # matmul-input dtype (f32 or bf16); accum is f32

    x = x_ref[...]                                   # (b_tile, n_n, in_f)
    x2 = x.reshape(b_tile * n_n, x.shape[-1])        # fold batch into MXU M dim

    # Head-invariant work hoisted out of the per-head loop.
    mask = adj_ref[...] == 0                         # (b_tile, n_n, n_n)
    sp_b = sp_ref[...][None]                         # (1, n_n, n_n)
    neg_big = jnp.float32(-10000000000.0)

    outs = []
    attns = []
    for h in range(n_heads):
        # Per-head projections (weights are pre-split per head in glue; the
        # q weights/bias are pre-scaled by 1/sqrt(dk), so no per-head divide).
        qh = (jnp.dot(x2, wq_ref[h], preferred_element_type=jnp.float32)
              + bq_ref[h]).reshape(b_tile, n_n, dk)
        kh = (jnp.dot(x2, wk_ref[h], preferred_element_type=jnp.float32)
              + bk_ref[h]).reshape(b_tile, n_n, dk)
        vh = (jnp.dot(x2, wv_ref[h], preferred_element_type=jnp.float32)
              + bv_ref[h]).reshape(b_tile, n_n, dk)

        # Batched Q @ K^T (contraction over dk) -- no explicit K transpose.
        s = jnp.einsum("bqd,bkd->bqk", qh.astype(cdt), kh.astype(cdt),
                       preferred_element_type=jnp.float32)
        s = s + sp_b
        s = jnp.where(mask, neg_big, s)

        # Numerically-stable softmax over the last dim (f32).
        m = jnp.max(s, axis=-1, keepdims=True)
        e = jnp.exp(s - m)
        denom = jnp.sum(e, axis=-1, keepdims=True)
        attn = e * pl.reciprocal(denom, approx=False)

        if attn_ref is not None:
            attns.append(attn)

        outs.append(jnp.einsum("bqk,bkd->bqd", attn.astype(cdt), vh.astype(cdt),
                               preferred_element_type=jnp.float32))

    # Single lane-dense store: (b_tile, n_n, out_f) in concat-head layout.
    out_ref[...] = jnp.concatenate(outs, axis=-1).astype(out_ref.dtype)

    if attn_ref is not None:
        # One dense full-block store instead of n_heads partial stores.
        attn_ref[...] = jnp.stack(attns, axis=1).astype(attn_ref.dtype)


def _choose_b_tile(bs, max_tile=8):
    """Largest divisor of bs <= max_tile that keeps >= 2 grid steps (megacore)."""
    best = 1
    for t in range(1, min(max_tile, bs) + 1):
        if bs % t == 0 and (bs // t) >= 2:
            best = t
    return best


def multi_head_attention(x, adj, wq, bq, wk, bk, wv, bv, sp_enc=None, *,
                         n_heads, compute_dtype=jnp.float32, with_attn=True):
    """Pallas implementation of MultiHeadAttention.forward.

    x:   (bs, n_n, in_f) f32
    adj: (bs, n_n, n_n)  f32 (0/1 mask)
    w*:  (in_f, out_f) f32, b*: (out_f,) f32
    sp_enc: (n_n, n_n) f32 or None
    Returns (out (bs, n_n, out_f), attn (bs, n_heads, n_n, n_n) or None).
    """
    bs, n_n, in_f = x.shape
    out_f = wq.shape[1]
    assert out_f % n_heads == 0
    dk = out_f // n_heads
    inv_scale = 1.0 / math.sqrt(dk)

    if sp_enc is None:
        sp = jnp.zeros((n_n, n_n), jnp.float32)
    else:
        # PyTorch: sp_enc[range(n_n), range(n_n)] = 0.0
        sp = sp_enc.astype(jnp.float32) * (1.0 - jnp.eye(n_n, dtype=jnp.float32))

    def split_w(w):
        # (in_f, out_f) -> (n_heads, in_f, dk); column h*dk + d -> [h, :, d]
        return jnp.transpose(w.reshape(in_f, n_heads, dk), (1, 0, 2))

    def split_b(b):
        return b.reshape(n_heads, 1, dk)

    # q-side pre-scaled by 1/sqrt(dk) so the kernel never divides scores.
    wq_h = (split_w(wq) * inv_scale).astype(compute_dtype)
    wk_h = split_w(wk).astype(compute_dtype)
    wv_h = split_w(wv).astype(compute_dtype)
    bq_h = (split_b(bq) * inv_scale).astype(jnp.float32)
    bk_h = split_b(bk).astype(jnp.float32)
    bv_h = split_b(bv).astype(jnp.float32)

    xc = x.astype(compute_dtype)
    adjf = adj.astype(jnp.float32)

    b_tile = _choose_b_tile(bs)
    grid = (bs // b_tile,)

    kernel = functools.partial(_mha_kernel, n_heads=n_heads, dk=dk,
                               n_n=n_n, b_tile=b_tile)

    const3 = lambda shape: pl.BlockSpec(shape, lambda b: (0, 0, 0))

    in_specs = [
        pl.BlockSpec((b_tile, n_n, in_f), lambda b: (b, 0, 0)),   # x
        const3((n_heads, in_f, dk)),                              # wq (scaled)
        const3((n_heads, 1, dk)),                                 # bq (scaled)
        const3((n_heads, in_f, dk)),                              # wk
        const3((n_heads, 1, dk)),                                 # bk
        const3((n_heads, in_f, dk)),                              # wv
        const3((n_heads, 1, dk)),                                 # bv
        pl.BlockSpec((b_tile, n_n, n_n), lambda b: (b, 0, 0)),    # adj
        pl.BlockSpec((n_n, n_n), lambda b: (0, 0)),               # sp_enc
    ]

    out_shapes = [jax.ShapeDtypeStruct((bs, n_n, out_f), jnp.float32)]
    out_specs = [pl.BlockSpec((b_tile, n_n, out_f), lambda b: (b, 0, 0))]
    if with_attn:
        out_shapes.append(
            jax.ShapeDtypeStruct((bs, n_heads, n_n, n_n), jnp.float32))
        out_specs.append(
            pl.BlockSpec((b_tile, n_heads, n_n, n_n), lambda b: (b, 0, 0, 0)))

    results = pl.pallas_call(
        kernel,
        out_shape=tuple(out_shapes),
        grid_spec=pltpu.PrefetchScalarGridSpec(
            num_scalar_prefetch=0,
            grid=grid,
            in_specs=in_specs,
            out_specs=tuple(out_specs),
        ),
        compiler_params=pltpu.CompilerParams(
            dimension_semantics=("parallel",)),
    )(xc, wq_h, bq_h, wk_h, bk_h, wv_h, bv_h, adjf, sp)

    out_concat = results[0]   # (bs, n_n, out_f) in concat-head (lane-dense) layout
    # PyTorch layout: out.permute(0,2,3,1).reshape -> head-interleaved columns.
    # This tiny permute is done here in glue on the final small tensor.
    out = out_concat.reshape(bs, n_n, n_heads, dk).transpose(0, 1, 3, 2)
    out = out.reshape(bs, n_n, out_f)
    attn = results[1] if with_attn else None
    return out, attn


def _xavier_uniform(key, in_f, out_f, gain):
    # Matches nn.init.xavier_uniform_ bound; stored as (in_f, out_f).
    bound = gain * math.sqrt(6.0 / (in_f + out_f))
    return jax.random.uniform(key, (in_f, out_f), jnp.float32, -bound, bound)


def _reference(x, adj, wq, bq, wk, bk, wv, bv, sp_enc, n_heads):
    bs, n_n, _ = x.shape
    out_f = wq.shape[1]
    dk = out_f // n_heads
    scale = math.sqrt(dk)

    def proj(w, b):
        return (x @ w + b).reshape(bs, n_n, n_heads, dk).transpose(0, 2, 1, 3)

    q, k, v = proj(wq, bq), proj(wk, bk), proj(wv, bv)
    scores = jnp.einsum("bhqd,bhkd->bhqk", q, k) / scale
    if sp_enc is not None:
        sp = sp_enc * (1.0 - jnp.eye(n_n, dtype=sp_enc.dtype))
        scores = scores + sp[None, None]
    mask = jnp.broadcast_to(adj[:, None], scores.shape)
    scores = jnp.where(mask == 0, -10000000000.0, scores)
    attn = jax.nn.softmax(scores, axis=-1)
    out = jnp.einsum("bhqk,bhkd->bhqd", attn, v)
    out = jnp.transpose(out, (0, 2, 3, 1)).reshape(bs, n_n, -1)
    return out, attn


if __name__ == "__main__":
    bs, n_n = 4, 16
    in_features, out_features, n_heads = 32, 32, 4

    key = jax.random.PRNGKey(0)
    k_x, k_adj, k_sp, kq, kk, kv, kbq, kbk, kbv = jax.random.split(key, 9)

    x = jax.random.normal(k_x, (bs, n_n, in_features), jnp.float32)

    # random 0/1 adjacency with self-loops
    adj = (jax.random.uniform(k_adj, (bs, n_n, n_n)) > 0.5).astype(jnp.float32)
    adj = jnp.maximum(adj, jnp.eye(n_n, dtype=jnp.float32)[None])

    sp_enc = jax.random.normal(k_sp, (n_n, n_n), jnp.float32)

    gain = 1.0 / math.sqrt(2.0)
    wq = _xavier_uniform(kq, in_features, out_features, gain)
    wk = _xavier_uniform(kk, in_features, out_features, gain)
    wv = _xavier_uniform(kv, in_features, out_features, gain)
    bb = 1.0 / math.sqrt(in_features)  # PyTorch default Linear bias init range
    bq = jax.random.uniform(kbq, (out_features,), jnp.float32, -bb, bb)
    bk = jax.random.uniform(kbk, (out_features,), jnp.float32, -bb, bb)
    bv = jax.random.uniform(kbv, (out_features,), jnp.float32, -bb, bb)

    out_ref, attn_ref = _reference(x, adj, wq, bq, wk, bk, wv, bv, sp_enc,
                                   n_heads)

    # 1) f32 path (exact module semantics, tight tolerance).
    out, attn = multi_head_attention(x, adj, wq, bq, wk, bk, wv, bv, sp_enc,
                                     n_heads=n_heads)
    jax.block_until_ready((out, attn))
    assert out.shape == (bs, n_n, out_features)
    assert attn.shape == (bs, n_heads, n_n, n_n)
    assert jnp.allclose(out, out_ref, atol=1e-4, rtol=1e-4)
    assert jnp.allclose(attn, attn_ref, atol=1e-5, rtol=1e-5)

    # 2) bf16 MXU-input path (v6e/v7x optimization) -- looser tolerance.
    out_bf, attn_bf = multi_head_attention(x, adj, wq, bq, wk, bk, wv, bv,
                                           sp_enc, n_heads=n_heads,
                                           compute_dtype=jnp.bfloat16)
    jax.block_until_ready((out_bf, attn_bf))
    assert jnp.allclose(out_bf, out_ref, atol=5e-2, rtol=5e-2)
    assert jnp.allclose(attn_bf, attn_ref, atol=3e-2, rtol=3e-2)

    # 3) attention-matrix-free path (skips the dominant attn HBM writes).
    out_na, attn_na = multi_head_attention(x, adj, wq, bq, wk, bk, wv, bv,
                                           sp_enc, n_heads=n_heads,
                                           with_attn=False)
    jax.block_until_ready(out_na)
    assert attn_na is None
    assert jnp.allclose(out_na, out_ref, atol=1e-4, rtol=1e-4)

    print("KERNEL_OK")
</pallas_src>

<mosaic_0001>
module attributes {stable_mosaic.version = 11 : i64} {
  func.func @_mha_kernel(%arg0: i32, %arg1: memref<2x16x32xf32, #tpu.memory_space<vmem>>, %arg2: memref<4x32x8xf32, #tpu.memory_space<vmem>>, %arg3: memref<4x1x8xf32, #tpu.memory_space<vmem>>, %arg4: memref<4x32x8xf32, #tpu.memory_space<vmem>>, %arg5: memref<4x1x8xf32, #tpu.memory_space<vmem>>, %arg6: memref<4x32x8xf32, #tpu.memory_space<vmem>>, %arg7: memref<4x1x8xf32, #tpu.memory_space<vmem>>, %arg8: memref<2x16x16xf32, #tpu.memory_space<vmem>>, %arg9: memref<16x16xf32, #tpu.memory_space<vmem>>, %arg10: memref<2x16x32xf32, #tpu.memory_space<vmem>>, %arg11: memref<2x4x16x16xf32, #tpu.memory_space<vmem>>) attributes {dimension_semantics = [#tpu.dimension_semantics<parallel>], iteration_bounds = array<i64: 2>, scalar_prefetch = 0 : i64, scratch_operands = 0 : i64, tpu.core_type = #tpu.core_type<tc>, window_params = [{transform_indices = @transform_0, window_bounds = array<i64: 2, 16, 32>}, {pipeline_mode = #tpu.pipeline_mode<synchronous>, transform_indices = @transform_1, window_bounds = array<i64: 4, 32, 8>}, {pipeline_mode = #tpu.pipeline_mode<synchronous>, transform_indices = @transform_2, window_bounds = array<i64: 4, 1, 8>}, {pipeline_mode = #tpu.pipeline_mode<synchronous>, transform_indices = @transform_3, window_bounds = array<i64: 4, 32, 8>}, {pipeline_mode = #tpu.pipeline_mode<synchronous>, transform_indices = @transform_4, window_bounds = array<i64: 4, 1, 8>}, {pipeline_mode = #tpu.pipeline_mode<synchronous>, transform_indices = @transform_5, window_bounds = array<i64: 4, 32, 8>}, {pipeline_mode = #tpu.pipeline_mode<synchronous>, transform_indices = @transform_6, window_bounds = array<i64: 4, 1, 8>}, {transform_indices = @transform_7, window_bounds = array<i64: 2, 16, 16>}, {pipeline_mode = #tpu.pipeline_mode<synchronous>, transform_indices = @transform_8, window_bounds = array<i64: 16, 16>}, {transform_indices = @transform_9, window_bounds = array<i64: 2, 16, 32>}, {transform_indices = @transform_10, window_bounds = array<i64: 2, 4, 16, 16>}]} {
    %c0 = arith.constant 0 : index
    %c0_0 = arith.constant 0 : index
    %c0_1 = arith.constant 0 : index
    %0 = vector.load %arg1[%c0, %c0_0, %c0_1] : memref<2x16x32xf32, #tpu.memory_space<vmem>>, vector<2x16x32xf32>
    %1 = vector.shape_cast %0 : vector<2x16x32xf32> to vector<32x32xf32>
    %c0_2 = arith.constant 0 : index
    %c0_3 = arith.constant 0 : index
    %c0_4 = arith.constant 0 : index
    %2 = vector.load %arg8[%c0_2, %c0_3, %c0_4] : memref<2x16x16xf32, #tpu.memory_space<vmem>>, vector<2x16x16xf32>
    %cst = arith.constant 0.000000e+00 : f32
    %3 = vector.broadcast %cst : f32 to vector<2x16x16xf32>
    %4 = arith.cmpf oeq, %2, %3 : vector<2x16x16xf32>
    %c0_5 = arith.constant 0 : index
    %c0_6 = arith.constant 0 : index
    %5 = vector.load %arg9[%c0_5, %c0_6] : memref<16x16xf32, #tpu.memory_space<vmem>>, vector<16x16xf32>
    %6 = vector.shape_cast %5 : vector<16x16xf32> to vector<1x16x16xf32>
    %c0_7 = arith.constant 0 : index
    %c0_8 = arith.constant 0 : index
    %c0_9 = arith.constant 0 : index
    %7 = vector.load %arg2[%c0_7, %c0_8, %c0_9] : memref<4x32x8xf32, #tpu.memory_space<vmem>>, vector<1x32x8xf32>
    %8 = vector.shape_cast %7 : vector<1x32x8xf32> to vector<32x8xf32>
    %cst_10 = arith.constant dense<0.000000e+00> : vector<32x8xf32>
    %9 = tpu.matmul %1, %8, %cst_10 {dimension_numbers = #tpu.dot_dimension_numbers<[1], [0], [0], [1], [0, 0, 1, 1], [], []>} : vector<32x32xf32>, vector<32x8xf32>, vector<32x8xf32> -> vector<32x8xf32>
    %c0_11 = arith.constant 0 : index
    %c0_12 = arith.constant 0 : index
    %c0_13 = arith.constant 0 : index
    %10 = vector.load %arg3[%c0_11, %c0_12, %c0_13] : memref<4x1x8xf32, #tpu.memory_space<vmem>>, vector<1x1x8xf32>
    %11 = vector.shape_cast %10 : vector<1x1x8xf32> to vector<1x8xf32>
    %12 = vector.broadcast %11 : vector<1x8xf32> to vector<32x8xf32>
    %13 = arith.addf %9, %12 : vector<32x8xf32>
    %14 = vector.shape_cast %13 : vector<32x8xf32> to vector<2x16x8xf32>
    %c0_14 = arith.constant 0 : index
    %c0_15 = arith.constant 0 : index
    %c0_16 = arith.constant 0 : index
    %15 = vector.load %arg4[%c0_14, %c0_15, %c0_16] : memref<4x32x8xf32, #tpu.memory_space<vmem>>, vector<1x32x8xf32>
    %16 = vector.shape_cast %15 : vector<1x32x8xf32> to vector<32x8xf32>
    %cst_17 = arith.constant dense<0.000000e+00> : vector<32x8xf32>
    %17 = tpu.matmul %1, %16, %cst_17 {dimension_numbers = #tpu.dot_dimension_numbers<[1], [0], [0], [1], [0, 0, 1, 1], [], []>} : vector<32x32xf32>, vector<32x8xf32>, vector<32x8xf32> -> vector<32x8xf32>
    %c0_18 = arith.constant 0 : index
    %c0_19 = arith.constant 0 : index
    %c0_20 = arith.constant 0 : index
    %18 = vector.load %arg5[%c0_18, %c0_19, %c0_20] : memref<4x1x8xf32, #tpu.memory_space<vmem>>, vector<1x1x8xf32>
    %19 = vector.shape_cast %18 : vector<1x1x8xf32> to vector<1x8xf32>
    %20 = vector.broadcast %19 : vector<1x8xf32> to vector<32x8xf32>
    %21 = arith.addf %17, %20 : vector<32x8xf32>
    %22 = vector.shape_cast %21 : vector<32x8xf32> to vector<2x16x8xf32>
    %c0_21 = arith.constant 0 : index
    %c0_22 = arith.constant 0 : index
    %c0_23 = arith.constant 0 : index
    %23 = vector.load %arg6[%c0_21, %c0_22, %c0_23] : memref<4x32x8xf32, #tpu.memory_space<vmem>>, vector<1x32x8xf32>
    %24 = vector.shape_cast %23 : vector<1x32x8xf32> to vector<32x8xf32>
    %cst_24 = arith.constant dense<0.000000e+00> : vector<32x8xf32>
    %25 = tpu.matmul %1, %24, %cst_24 {dimension_numbers = #tpu.dot_dimension_numbers<[1], [0], [0], [1], [0, 0, 1, 1], [], []>} : vector<32x32xf32>, vector<32x8xf32>, vector<32x8xf32> -> vector<32x8xf32>
    %c0_25 = arith.constant 0 : index
    %c0_26 = arith.constant 0 : index
    %c0_27 = arith.constant 0 : index
    %26 = vector.load %arg7[%c0_25, %c0_26, %c0_27] : memref<4x1x8xf32, #tpu.memory_space<vmem>>, vector<1x1x8xf32>
    %27 = vector.shape_cast %26 : vector<1x1x8xf32> to vector<1x8xf32>
    %28 = vector.broadcast %27 : vector<1x8xf32> to vector<32x8xf32>
    %29 = arith.addf %25, %28 : vector<32x8xf32>
    %30 = vector.shape_cast %29 : vector<32x8xf32> to vector<2x16x8xf32>
    "tpu.trace_start"() <{level = 10 : i32, message = "bqd,bkd->bqk"}> : () -> ()
    %cst_28 = arith.constant dense<0.000000e+00> : vector<2x16x16xf32>
    %31 = tpu.matmul %14, %22, %cst_28 {dimension_numbers = #tpu.dot_dimension_numbers<[2], [2], [1], [1], [0, 0, 0, 1, 1, 1], [0], [0]>} : vector<2x16x8xf32>, vector<2x16x8xf32>, vector<2x16x16xf32> -> vector<2x16x16xf32>
    "tpu.trace_stop"() : () -> ()
    %32 = vector.broadcast %6 : vector<1x16x16xf32> to vector<2x16x16xf32>
    %33 = arith.addf %31, %32 : vector<2x16x16xf32>
    %cst_29 = arith.constant -1.000000e+10 : f32
    %34 = vector.broadcast %cst_29 : f32 to vector<2x16x16xf32>
    %35 = arith.select %4, %34, %33 : vector<2x16x16xi1>, vector<2x16x16xf32>
    %cst_30 = arith.constant dense<0xFF800000> : vector<2x16xf32>
    %36 = vector.multi_reduction <maximumf>, %35, %cst_30 [2] : vector<2x16x16xf32> to vector<2x16xf32>
    %37 = vector.shape_cast %36 : vector<2x16xf32> to vector<2x16x1xf32>
    %38 = vector.broadcast %37 : vector<2x16x1xf32> to vector<2x16x16xf32>
    %39 = arith.subf %35, %38 : vector<2x16x16xf32>
    %40 = math.exp %39 : vector<2x16x16xf32>
    %cst_31 = arith.constant dense<0.000000e+00> : vector<2x16xf32>
    %41 = vector.multi_reduction <add>, %40, %cst_31 [2] : vector<2x16x16xf32> to vector<2x16xf32>
    %42 = vector.shape_cast %41 : vector<2x16xf32> to vector<2x16x1xf32>
    %43 = tpu.reciprocal %42 : vector<2x16x1xf32> -> vector<2x16x1xf32>
    %44 = vector.broadcast %43 : vector<2x16x1xf32> to vector<2x16x16xf32>
    %45 = arith.mulf %40, %44 : vector<2x16x16xf32>
    "tpu.trace_start"() <{level = 10 : i32, message = "bqk,bkd->bqd"}> : () -> ()
    %cst_32 = arith.constant dense<0.000000e+00> : vector<2x16x8xf32>
    %46 = tpu.matmul %45, %30, %cst_32 {dimension_numbers = #tpu.dot_dimension_numbers<[2], [1], [1], [2], [0, 0, 0, 1, 1, 2], [0], [0]>} : vector<2x16x16xf32>, vector<2x16x8xf32>, vector<2x16x8xf32> -> vector<2x16x8xf32>
    "tpu.trace_stop"() : () -> ()
    %c1 = arith.constant 1 : index
    %c0_33 = arith.constant 0 : index
    %c0_34 = arith.constant 0 : index
    %47 = vector.load %arg2[%c1, %c0_33, %c0_34] : memref<4x32x8xf32, #tpu.memory_space<vmem>>, vector<1x32x8xf32>
    %48 = vector.shape_cast %47 : vector<1x32x8xf32> to vector<32x8xf32>
    %cst_35 = arith.constant dense<0.000000e+00> : vector<32x8xf32>
    %49 = tpu.matmul %1, %48, %cst_35 {dimension_numbers = #tpu.dot_dimension_numbers<[1], [0], [0], [1], [0, 0, 1, 1], [], []>} : vector<32x32xf32>, vector<32x8xf32>, vector<32x8xf32> -> vector<32x8xf32>
    %c1_36 = arith.constant 1 : index
    %c0_37 = arith.constant 0 : index
    %c0_38 = arith.constant 0 : index
    %50 = vector.load %arg3[%c1_36, %c0_37, %c0_38] : memref<4x1x8xf32, #tpu.memory_space<vmem>>, vector<1x1x8xf32>
    %51 = vector.shape_cast %50 : vector<1x1x8xf32> to vector<1x8xf32>
    %52 = vector.broadcast %51 : vector<1x8xf32> to vector<32x8xf32>
    %53 = arith.addf %49, %52 : vector<32x8xf32>
    %54 = vector.shape_cast %53 : vector<32x8xf32> to vector<2x16x8xf32>
    %c1_39 = arith.constant 1 : index
    %c0_40 = arith.constant 0 : index
    %c0_41 = arith.constant 0 : index
    %55 = vector.load %arg4[%c1_39, %c0_40, %c0_41] : memref<4x32x8xf32, #tpu.memory_space<vmem>>, vector<1x32x8xf32>
    %56 = vector.shape_cast %55 : vector<1x32x8xf32> to vector<32x8xf32>
    %cst_42 = arith.constant dense<0.000000e+00> : vector<32x8xf32>
    %57 = tpu.matmul %1, %56, %cst_42 {dimension_numbers = #tpu.dot_dimension_numbers<[1], [0], [0], [1], [0, 0, 1, 1], [], []>} : vector<32x32xf32>, vector<32x8xf32>, vector<32x8xf32> -> vector<32x8xf32>
    %c1_43 = arith.constant 1 : index
    %c0_44 = arith.constant 0 : index
    %c0_45 = arith.constant 0 : index
    %58 = vector.load %arg5[%c1_43, %c0_44, %c0_45] : memref<4x1x8xf32, #tpu.memory_space<vmem>>, vector<1x1x8xf32>
    %59 = vector.shape_cast %58 : vector<1x1x8xf32> to vector<1x8xf32>
    %60 = vector.broadcast %59 : vector<1x8xf32> to vector<32x8xf32>
    %61 = arith.addf %57, %60 : vector<32x8xf32>
    %62 = vector.shape_cast %61 : vector<32x8xf32> to vector<2x16x8xf32>
    %c1_46 = arith.constant 1 : index
    %c0_47 = arith.constant 0 : index
    %c0_48 = arith.constant 0 : index
    %63 = vector.load %arg6[%c1_46, %c0_47, %c0_48] : memref<4x32x8xf32, #tpu.memory_space<vmem>>, vector<1x32x8xf32>
    %64 = vector.shape_cast %63 : vector<1x32x8xf32> to vector<32x8xf32>
    %cst_49 = arith.constant dense<0.000000e+00> : vector<32x8xf32>
    %65 = tpu.matmul %1, %64, %cst_49 {dimension_numbers = #tpu.dot_dimension_numbers<[1], [0], [0], [1], [0, 0, 1, 1], [], []>} : vector<32x32xf32>, vector<32x8xf32>, vector<32x8xf32> -> vector<32x8xf32>
    %c1_50 = arith.constant 1 : index
    %c0_51 = arith.constant 0 : index
    %c0_52 = arith.constant 0 : index
    %66 = vector.load %arg7[%c1_50, %c0_51, %c0_52] : memref<4x1x8xf32, #tpu.memory_space<vmem>>, vector<1x1x8xf32>
    %67 = vector.shape_cast %66 : vector<1x1x8xf32> to vector<1x8xf32>
    %68 = vector.broadcast %67 : vector<1x8xf32> to vector<32x8xf32>
    %69 = arith.addf %65, %68 : vector<32x8xf32>
    %70 = vector.shape_cast %69 : vector<32x8xf32> to vector<2x16x8xf32>
    "tpu.trace_start"() <{level = 10 : i32, message = "bqd,bkd->bqk"}> : () -> ()
    %cst_53 = arith.constant dense<0.000000e+00> : vector<2x16x16xf32>
    %71 = tpu.matmul %54, %62, %cst_53 {dimension_numbers = #tpu.dot_dimension_numbers<[2], [2], [1], [1], [0, 0, 0, 1, 1, 1], [0], [0]>} : vector<2x16x8xf32>, vector<2x16x8xf32>, vector<2x16x16xf32> -> vector<2x16x16xf32>
    "tpu.trace_stop"() : () -> ()
    %72 = vector.broadcast %6 : vector<1x16x16xf32> to vector<2x16x16xf32>
    %73 = arith.addf %71, %72 : vector<2x16x16xf32>
    %cst_54 = arith.constant -1.000000e+10 : f32
    %74 = vector.broadcast %cst_54 : f32 to vector<2x16x16xf32>
    %75 = arith.select %4, %74, %73 : vector<2x16x16xi1>, vector<2x16x16xf32>
    %cst_55 = arith.constant dense<0xFF800000> : vector<2x16xf32>
    %76 = vector.multi_reduction <maximumf>, %75, %cst_55 [2] : vector<2x16x16xf32> to vector<2x16xf32>
    %77 = vector.shape_cast %76 : vector<2x16xf32> to vector<2x16x1xf32>
    %78 = vector.broadcast %77 : vector<2x16x1xf32> to vector<2x16x16xf32>
    %79 = arith.subf %75, %78 : vector<2x16x16xf32>
    %80 = math.exp %79 : vector<2x16x16xf32>
    %cst_56 = arith.constant dense<0.000000e+00> : vector<2x16xf32>
    %81 = vector.multi_reduction <add>, %80, %cst_56 [2] : vector<2x16x16xf32> to vector<2x16xf32>
    %82 = vector.shape_cast %81 : vector<2x16xf32> to vector<2x16x1xf32>
    %83 = tpu.reciprocal %82 : vector<2x16x1xf32> -> vector<2x16x1xf32>
    %84 = vector.broadcast %83 : vector<2x16x1xf32> to vector<2x16x16xf32>
    %85 = arith.mulf %80, %84 : vector<2x16x16xf32>
    "tpu.trace_start"() <{level = 10 : i32, message = "bqk,bkd->bqd"}> : () -> ()
    %cst_57 = arith.constant dense<0.000000e+00> : vector<2x16x8xf32>
    %86 = tpu.matmul %85, %70, %cst_57 {dimension_numbers = #tpu.dot_dimension_numbers<[2], [1], [1], [2], [0, 0, 0, 1, 1, 2], [0], [0]>} : vector<2x16x16xf32>, vector<2x16x8xf32>, vector<2x16x8xf32> -> vector<2x16x8xf32>
    "tpu.trace_stop"() : () -> ()
    %c2 = arith.constant 2 : index
    %c0_58 = arith.constant 0 : index
    %c0_59 = arith.constant 0 : index
    %87 = vector.load %arg2[%c2, %c0_58, %c0_59] : memref<4x32x8xf32, #tpu.memory_space<vmem>>, vector<1x32x8xf32>
    %88 = vector.shape_cast %87 : vector<1x32x8xf32> to vector<32x8xf32>
    %cst_60 = arith.constant dense<0.000000e+00> : vector<32x8xf32>
    %89 = tpu.matmul %1, %88, %cst_60 {dimension_numbers = #tpu.dot_dimension_numbers<[1], [0], [0], [1], [0, 0, 1, 1], [], []>} : vector<32x32xf32>, vector<32x8xf32>, vector<32x8xf32> -> vector<32x8xf32>
    %c2_61 = arith.constant 2 : index
    %c0_62 = arith.constant 0 : index
    %c0_63 = arith.constant 0 : index
    %90 = vector.load %arg3[%c2_61, %c0_62, %c0_63] : memref<4x1x8xf32, #tpu.memory_space<vmem>>, vector<1x1x8xf32>
    %91 = vector.shape_cast %90 : vector<1x1x8xf32> to vector<1x8xf32>
    %92 = vector.broadcast %91 : vector<1x8xf32> to vector<32x8xf32>
    %93 = arith.addf %89, %92 : vector<32x8xf32>
    %94 = vector.shape_cast %93 : vector<32x8xf32> to vector<2x16x8xf32>
    %c2_64 = arith.constant 2 : index
    %c0_65 = arith.constant 0 : index
    %c0_66 = arith.constant 0 : index
    %95 = vector.load %arg4[%c2_64, %c0_65, %c0_66] : memref<4x32x8xf32, #tpu.memory_space<vmem>>, vector<1x32x8xf32>
    %96 = vector.shape_cast %95 : vector<1x32x8xf32> to vector<32x8xf32>
    %cst_67 = arith.constant dense<0.000000e+00> : vector<32x8xf32>
    %97 = tpu.matmul %1, %96, %cst_67 {dimension_numbers = #tpu.dot_dimension_numbers<[1], [0], [0], [1], [0, 0, 1, 1], [], []>} : vector<32x32xf32>, vector<32x8xf32>, vector<32x8xf32> -> vector<32x8xf32>
    %c2_68 = arith.constant 2 : index
    %c0_69 = arith.constant 0 : index
    %c0_70 = arith.constant 0 : index
    %98 = vector.load %arg5[%c2_68, %c0_69, %c0_70] : memref<4x1x8xf32, #tpu.memory_space<vmem>>, vector<1x1x8xf32>
    %99 = vector.shape_cast %98 : vector<1x1x8xf32> to vector<1x8xf32>
    %100 = vector.broadcast %99 : vector<1x8xf32> to vector<32x8xf32>
    %101 = arith.addf %97, %100 : vector<32x8xf32>
    %102 = vector.shape_cast %101 : vector<32x8xf32> to vector<2x16x8xf32>
    %c2_71 = arith.constant 2 : index
    %c0_72 = arith.constant 0 : index
    %c0_73 = arith.constant 0 : index
    %103 = vector.load %arg6[%c2_71, %c0_72, %c0_73] : memref<4x32x8xf32, #tpu.memory_space<vmem>>, vector<1x32x8xf32>
    %104 = vector.shape_cast %103 : vector<1x32x8xf32> to vector<32x8xf32>
    %cst_74 = arith.constant dense<0.000000e+00> : vector<32x8xf32>
    %105 = tpu.matmul %1, %104, %cst_74 {dimension_numbers = #tpu.dot_dimension_numbers<[1], [0], [0], [1], [0, 0, 1, 1], [], []>} : vector<32x32xf32>, vector<32x8xf32>, vector<32x8xf32> -> vector<32x8xf32>
    %c2_75 = arith.constant 2 : index
    %c0_76 = arith.constant 0 : index
    %c0_77 = arith.constant 0 : index
    %106 = vector.load %arg7[%c2_75, %c0_76, %c0_77] : memref<4x1x8xf32, #tpu.memory_space<vmem>>, vector<1x1x8xf32>
    %107 = vector.shape_cast %106 : vector<1x1x8xf32> to vector<1x8xf32>
    %108 = vector.broadcast %107 : vector<1x8xf32> to vector<32x8xf32>
    %109 = arith.addf %105, %108 : vector<32x8xf32>
    %110 = vector.shape_cast %109 : vector<32x8xf32> to vector<2x16x8xf32>
    "tpu.trace_start"() <{level = 10 : i32, message = "bqd,bkd->bqk"}> : () -> ()
    %cst_78 = arith.constant dense<0.000000e+00> : vector<2x16x16xf32>
    %111 = tpu.matmul %94, %102, %cst_78 {dimension_numbers = #tpu.dot_dimension_numbers<[2], [2], [1], [1], [0, 0, 0, 1, 1, 1], [0], [0]>} : vector<2x16x8xf32>, vector<2x16x8xf32>, vector<2x16x16xf32> -> vector<2x16x16xf32>
    "tpu.trace_stop"() : () -> ()
    %112 = vector.broadcast %6 : vector<1x16x16xf32> to vector<2x16x16xf32>
    %113 = arith.addf %111, %112 : vector<2x16x16xf32>
    %cst_79 = arith.constant -1.000000e+10 : f32
    %114 = vector.broadcast %cst_79 : f32 to vector<2x16x16xf32>
    %115 = arith.select %4, %114, %113 : vector<2x16x16xi1>, vector<2x16x16xf32>
    %cst_80 = arith.constant dense<0xFF800000> : vector<2x16xf32>
    %116 = vector.multi_reduction <maximumf>, %115, %cst_80 [2] : vector<2x16x16xf32> to vector<2x16xf32>
    %117 = vector.shape_cast %116 : vector<2x16xf32> to vector<2x16x1xf32>
    %118 = vector.broadcast %117 : vector<2x16x1xf32> to vector<2x16x16xf32>
    %119 = arith.subf %115, %118 : vector<2x16x16xf32>
    %120 = math.exp %119 : vector<2x16x16xf32>
    %cst_81 = arith.constant dense<0.000000e+00> : vector<2x16xf32>
    %121 = vector.multi_reduction <add>, %120, %cst_81 [2] : vector<2x16x16xf32> to vector<2x16xf32>
    %122 = vector.shape_cast %121 : vector<2x16xf32> to vector<2x16x1xf32>
    %123 = tpu.reciprocal %122 : vector<2x16x1xf32> -> vector<2x16x1xf32>
    %124 = vector.broadcast %123 : vector<2x16x1xf32> to vector<2x16x16xf32>
    %125 = arith.mulf %120, %124 : vector<2x16x16xf32>
    "tpu.trace_start"() <{level = 10 : i32, message = "bqk,bkd->bqd"}> : () -> ()
    %cst_82 = arith.constant dense<0.000000e+00> : vector<2x16x8xf32>
    %126 = tpu.matmul %125, %110, %cst_82 {dimension_numbers = #tpu.dot_dimension_numbers<[2], [1], [1], [2], [0, 0, 0, 1, 1, 2], [0], [0]>} : vector<2x16x16xf32>, vector<2x16x8xf32>, vector<2x16x8xf32> -> vector<2x16x8xf32>
    "tpu.trace_stop"() : () -> ()
    %c3 = arith.constant 3 : index
    %c0_83 = arith.constant 0 : index
    %c0_84 = arith.constant 0 : index
    %127 = vector.load %arg2[%c3, %c0_83, %c0_84] : memref<4x32x8xf32, #tpu.memory_space<vmem>>, vector<1x32x8xf32>
    %128 = vector.shape_cast %127 : vector<1x32x8xf32> to vector<32x8xf32>
    %cst_85 = arith.constant dense<0.000000e+00> : vector<32x8xf32>
    %129 = tpu.matmul %1, %128, %cst_85 {dimension_numbers = #tpu.dot_dimension_numbers<[1], [0], [0], [1], [0, 0, 1, 1], [], []>} : vector<32x32xf32>, vector<32x8xf32>, vector<32x8xf32> -> vector<32x8xf32>
    %c3_86 = arith.constant 3 : index
    %c0_87 = arith.constant 0 : index
    %c0_88 = arith.constant 0 : index
    %130 = vector.load %arg3[%c3_86, %c0_87, %c0_88] : memref<4x1x8xf32, #tpu.memory_space<vmem>>, vector<1x1x8xf32>
    %131 = vector.shape_cast %130 : vector<1x1x8xf32> to vector<1x8xf32>
    %132 = vector.broadcast %131 : vector<1x8xf32> to vector<32x8xf32>
    %133 = arith.addf %129, %132 : vector<32x8xf32>
    %134 = vector.shape_cast %133 : vector<32x8xf32> to vector<2x16x8xf32>
    %c3_89 = arith.constant 3 : index
    %c0_90 = arith.constant 0 : index
    %c0_91 = arith.constant 0 : index
    %135 = vector.load %arg4[%c3_89, %c0_90, %c0_91] : memref<4x32x8xf32, #tpu.memory_space<vmem>>, vector<1x32x8xf32>
    %136 = vector.shape_cast %135 : vector<1x32x8xf32> to vector<32x8xf32>
    %cst_92 = arith.constant dense<0.000000e+00> : vector<32x8xf32>
    %137 = tpu.matmul %1, %136, %cst_92 {dimension_numbers = #tpu.dot_dimension_numbers<[1], [0], [0], [1], [0, 0, 1, 1], [], []>} : vector<32x32xf32>, vector<32x8xf32>, vector<32x8xf32> -> vector<32x8xf32>
    %c3_93 = arith.constant 3 : index
    %c0_94 = arith.constant 0 : index
    %c0_95 = arith.constant 0 : index
    %138 = vector.load %arg5[%c3_93, %c0_94, %c0_95] : memref<4x1x8xf32, #tpu.memory_space<vmem>>, vector<1x1x8xf32>
    %139 = vector.shape_cast %138 : vector<1x1x8xf32> to vector<1x8xf32>
    %140 = vector.broadcast %139 : vector<1x8xf32> to vector<32x8xf32>
    %141 = arith.addf %137, %140 : vector<32x8xf32>
    %142 = vector.shape_cast %141 : vector<32x8xf32> to vector<2x16x8xf32>
    %c3_96 = arith.constant 3 : index
    %c0_97 = arith.constant 0 : index
    %c0_98 = arith.constant 0 : index
    %143 = vector.load %arg6[%c3_96, %c0_97, %c0_98] : memref<4x32x8xf32, #tpu.memory_space<vmem>>, vector<1x32x8xf32>
    %144 = vector.shape_cast %143 : vector<1x32x8xf32> to vector<32x8xf32>
    %cst_99 = arith.constant dense<0.000000e+00> : vector<32x8xf32>
    %145 = tpu.matmul %1, %144, %cst_99 {dimension_numbers = #tpu.dot_dimension_numbers<[1], [0], [0], [1], [0, 0, 1, 1], [], []>} : vector<32x32xf32>, vector<32x8xf32>, vector<32x8xf32> -> vector<32x8xf32>
    %c3_100 = arith.constant 3 : index
    %c0_101 = arith.constant 0 : index
    %c0_102 = arith.constant 0 : index
    %146 = vector.load %arg7[%c3_100, %c0_101, %c0_102] : memref<4x1x8xf32, #tpu.memory_space<vmem>>, vector<1x1x8xf32>
    %147 = vector.shape_cast %146 : vector<1x1x8xf32> to vector<1x8xf32>
    %148 = vector.broadcast %147 : vector<1x8xf32> to vector<32x8xf32>
    %149 = arith.addf %145, %148 : vector<32x8xf32>
    %150 = vector.shape_cast %149 : vector<32x8xf32> to vector<2x16x8xf32>
    "tpu.trace_start"() <{level = 10 : i32, message = "bqd,bkd->bqk"}> : () -> ()
    %cst_103 = arith.constant dense<0.000000e+00> : vector<2x16x16xf32>
    %151 = tpu.matmul %134, %142, %cst_103 {dimension_numbers = #tpu.dot_dimension_numbers<[2], [2], [1], [1], [0, 0, 0, 1, 1, 1], [0], [0]>} : vector<2x16x8xf32>, vector<2x16x8xf32>, vector<2x16x16xf32> -> vector<2x16x16xf32>
    "tpu.trace_stop"() : () -> ()
    %152 = vector.broadcast %6 : vector<1x16x16xf32> to vector<2x16x16xf32>
    %153 = arith.addf %151, %152 : vector<2x16x16xf32>
    %cst_104 = arith.constant -1.000000e+10 : f32
    %154 = vector.broadcast %cst_104 : f32 to vector<2x16x16xf32>
    %155 = arith.select %4, %154, %153 : vector<2x16x16xi1>, vector<2x16x16xf32>
    %cst_105 = arith.constant dense<0xFF800000> : vector<2x16xf32>
    %156 = vector.multi_reduction <maximumf>, %155, %cst_105 [2] : vector<2x16x16xf32> to vector<2x16xf32>
    %157 = vector.shape_cast %156 : vector<2x16xf32> to vector<2x16x1xf32>
    %158 = vector.broadcast %157 : vector<2x16x1xf32> to vector<2x16x16xf32>
    %159 = arith.subf %155, %158 : vector<2x16x16xf32>
    %160 = math.exp %159 : vector<2x16x16xf32>
    %cst_106 = arith.constant dense<0.000000e+00> : vector<2x16xf32>
    %161 = vector.multi_reduction <add>, %160, %cst_106 [2] : vector<2x16x16xf32> to vector<2x16xf32>
    %162 = vector.shape_cast %161 : vector<2x16xf32> to vector<2x16x1xf32>
    %163 = tpu.reciprocal %162 : vector<2x16x1xf32> -> vector<2x16x1xf32>
    %164 = vector.broadcast %163 : vector<2x16x1xf32> to vector<2x16x16xf32>
    %165 = arith.mulf %160, %164 : vector<2x16x16xf32>
    "tpu.trace_start"() <{level = 10 : i32, message = "bqk,bkd->bqd"}> : () -> ()
    %cst_107 = arith.constant dense<0.000000e+00> : vector<2x16x8xf32>
    %166 = tpu.matmul %165, %150, %cst_107 {dimension_numbers = #tpu.dot_dimension_numbers<[2], [1], [1], [2], [0, 0, 0, 1, 1, 2], [0], [0]>} : vector<2x16x16xf32>, vector<2x16x8xf32>, vector<2x16x8xf32> -> vector<2x16x8xf32>
    "tpu.trace_stop"() : () -> ()
    %167 = tpu.concatenate %46, %86, %126, %166 in 2 : vector<2x16x8xf32>, vector<2x16x8xf32>, vector<2x16x8xf32>, vector<2x16x8xf32> -> vector<2x16x32xf32>
    %c0_108 = arith.constant 0 : index
    %c0_109 = arith.constant 0 : index
    %c0_110 = arith.constant 0 : index
    %168 = vector.load %arg10[%c0_108, %c0_109, %c0_110] : memref<2x16x32xf32, #tpu.memory_space<vmem>>, vector<2x16x32xf32>
    tpu.vector_store %arg10[%c0_108, %c0_109, %c0_110], %167 {strides = array<i32>} : memref<2x16x32xf32, #tpu.memory_space<vmem>>, vector<2x16x32xf32>,
    %169 = vector.shape_cast %45 : vector<2x16x16xf32> to vector<2x1x16x16xf32>
    %170 = vector.shape_cast %85 : vector<2x16x16xf32> to vector<2x1x16x16xf32>
    %171 = vector.shape_cast %125 : vector<2x16x16xf32> to vector<2x1x16x16xf32>
    %172 = vector.shape_cast %165 : vector<2x16x16xf32> to vector<2x1x16x16xf32>
    %173 = tpu.concatenate %169, %170, %171, %172 in 1 : vector<2x1x16x16xf32>, vector<2x1x16x16xf32>, vector<2x1x16x16xf32>, vector<2x1x16x16xf32> -> vector<2x4x16x16xf32>
    %c0_111 = arith.constant 0 : index
    %c0_112 = arith.constant 0 : index
    %c0_113 = arith.constant 0 : index
    %c0_114 = arith.constant 0 : index
    %174 = vector.load %arg11[%c0_111, %c0_112, %c0_113, %c0_114] : memref<2x4x16x16xf32, #tpu.memory_space<vmem>>, vector<2x4x16x16xf32>
    tpu.vector_store %arg11[%c0_111, %c0_112, %c0_113, %c0_114], %173 {strides = array<i32>} : memref<2x4x16x16xf32, #tpu.memory_space<vmem>>, vector<2x4x16x16xf32>,
    return
  }
  func.func @transform_0(%arg0: i32) -> (i32, i32, i32) {
    %c0_i32 = arith.constant 0 : i32
    %c0_i32_0 = arith.constant 0 : i32
    %c0_i32_1 = arith.constant 0 : i32
    return %arg0, %c0_i32, %c0_i32_0 : i32, i32, i32
  }
  func.func @transform_1(%arg0: i32) -> (i32, i32, i32) {
    %c0_i32 = arith.constant 0 : i32
    %c0_i32_0 = arith.constant 0 : i32
    %c0_i32_1 = arith.constant 0 : i32
    %c0_i32_2 = arith.constant 0 : i32
    return %c0_i32, %c0_i32_0, %c0_i32_1 : i32, i32, i32
  }
  func.func @transform_2(%arg0: i32) -> (i32, i32, i32) {
    %c0_i32 = arith.constant 0 : i32
    %c0_i32_0 = arith.constant 0 : i32
    %c0_i32_1 = arith.constant 0 : i32
    %c0_i32_2 = arith.constant 0 : i32
    return %c0_i32, %c0_i32_0, %c0_i32_1 : i32, i32, i32
  }
  func.func @transform_3(%arg0: i32) -> (i32, i32, i32) {
    %c0_i32 = arith.constant 0 : i32
    %c0_i32_0 = arith.constant 0 : i32
    %c0_i32_1 = arith.constant 0 : i32
    %c0_i32_2 = arith.constant 0 : i32
    return %c0_i32, %c0_i32_0, %c0_i32_1 : i32, i32, i32
  }
  func.func @transform_4(%arg0: i32) -> (i32, i32, i32) {
    %c0_i32 = arith.constant 0 : i32
    %c0_i32_0 = arith.constant 0 : i32
    %c0_i32_1 = arith.constant 0 : i32
    %c0_i32_2 = arith.constant 0 : i32
    return %c0_i32, %c0_i32_0, %c0_i32_1 : i32, i32, i32
  }
  func.func @transform_5(%arg0: i32) -> (i32, i32, i32) {
    %c0_i32 = arith.constant 0 : i32
    %c0_i32_0 = arith.constant 0 : i32
    %c0_i32_1 = arith.constant 0 : i32
    %c0_i32_2 = arith.constant 0 : i32
    return %c0_i32, %c0_i32_0, %c0_i32_1 : i32, i32, i32
  }
  func.func @transform_6(%arg0: i32) -> (i32, i32, i32) {
    %c0_i32 = arith.constant 0 : i32
    %c0_i32_0 = arith.constant 0 : i32
    %c0_i32_1 = arith.constant 0 : i32
    %c0_i32_2 = arith.constant 0 : i32
    return %c0_i32, %c0_i32_0, %c0_i32_1 : i32, i32, i32
  }
  func.func @transform_7(%arg0: i32) -> (i32, i32, i32) {
    %c0_i32 = arith.constant 0 : i32
    %c0_i32_0 = arith.constant 0 : i32
    %c0_i32_1 = arith.constant 0 : i32
    return %arg0, %c0_i32, %c0_i32_0 : i32, i32, i32
  }
  func.func @transform_8(%arg0: i32) -> (i32, i32) {
    %c0_i32 = arith.constant 0 : i32
    %c0_i32_0 = arith.constant 0 : i32
    %c0_i32_1 = arith.constant 0 : i32
    return %c0_i32, %c0_i32_0 : i32, i32
  }
  func.func @transform_9(%arg0: i32) -> (i32, i32, i32) {
    %c0_i32 = arith.constant 0 : i32
    %c0_i32_0 = arith.constant 0 : i32
    %c0_i32_1 = arith.constant 0 : i32
    return %arg0, %c0_i32, %c0_i32_0 : i32, i32, i32
  }
  func.func @transform_10(%arg0: i32) -> (i32, i32, i32, i32) {
    %c0_i32 = arith.constant 0 : i32
    %c0_i32_0 = arith.constant 0 : i32
    %c0_i32_1 = arith.constant 0 : i32
    %c0_i32_2 = arith.constant 0 : i32
    return %arg0, %c0_i32, %c0_i32_0, %c0_i32_1 : i32, i32, i32, i32
  }
}

</mosaic_0001>

<llo_original>
// kernel: tpu_custom_call.1
$region0: #{tpu_custom_call.1}
  #allocation0 [shape = 'u32[]', space=smem, size = 0x4, offset = 0x4, fixed_abs, tag = 'smem constant byte address 0x4 - core index']
  #allocation1 [shape = 'u32[72,128]{1,0:T(1,128)}', space=vmem, size = 0x9000, scoped, tag = 'internal scratch']
  %s0 = inlined_call_operand.vmem [shape: f32[4,16,32], index: 0, kind: input, shape index: {}]
  %s1 = inlined_call_operand.vmem [shape: f32[4,32,8], index: 1, kind: input, shape index: {}]
  %s2 = inlined_call_operand.vmem [shape: f32[4,1,8], index: 2, kind: input, shape index: {}]
  %s3 = inlined_call_operand.vmem [shape: f32[4,32,8], index: 3, kind: input, shape index: {}]
  %s4 = inlined_call_operand.vmem [shape: f32[4,1,8], index: 4, kind: input, shape index: {}]
  %s5 = inlined_call_operand.vmem [shape: f32[4,32,8], index: 5, kind: input, shape index: {}]
  %s6 = inlined_call_operand.vmem [shape: f32[4,1,8], index: 6, kind: input, shape index: {}]
  %s7 = inlined_call_operand.vmem [shape: f32[4,16,16], index: 7, kind: input, shape index: {}]
  %s8 = inlined_call_operand.vmem [shape: f32[16,16], index: 8, kind: input, shape index: {}]
  %s9 = inlined_call_operand.hbm [shape: f32[4,16,32], index: 9, kind: output, shape index: {0}]
  %s10 = inlined_call_operand.hbm [shape: f32[4,4,16,16], index: 10, kind: output, shape index: {1}]
  %11 = xla_tuple %s9, %s10
  %s12 = sld [smem:[#allocation0]]
  $region77: #{tpu_custom_call.1} parent=0
    _
  %s14 = ssub.s32 1, %s12
  %s15 = scalar_select 0, %s14, %s12
  $region1: #{tpu_custom_call.1} parent=0
    #allocation2 [shape = 'u8[32768]{0}', space=vmem, size = 0x8000, scoped, tag = 'output window, operand 0']
    #allocation3 [shape = 's32[2]{0}', space=sflag, size = 0x8, scoped, tag = 'scoped memory for tpu_custom_call.1']
    #allocation4 [shape = 'u8[131072]{0}', space=vmem, size = 0x20000, scoped, tag = 'output window, operand 1']
    #allocation5 [shape = 's32[2]{0}', space=sflag, size = 0x8, scoped, tag = 'scoped memory for tpu_custom_call.1']
    %16 = vsyncpa [#allocation3], 0
    %s17 = scalar_lea.sflag [#allocation3], 1
    %18 = vsyncpa %s17, 0
    %19 = vsyncpa [#allocation5], 0
    %s20 = scalar_lea.sflag [#allocation5], 1
    %21 = vsyncpa %s20, 0
    loop: start=0, step=1, limit=4
    $region2: #{tpu_custom_call.1} parent=1 // loop_pre_header
      _
    $region3: #{tpu_custom_call.1} parent=1 // loop_header
      %s23 = sphi 0, %s27
      %p24 = scmp.ge.s32.totalorder %s23, 4
      %s33 = sphi 0, %s35
      %s36 = sphi 0, %s33
      %s37 = sphi 0, %s36
      %s53 = sphi 0, %s37
      %s57 = sphi 0, %s57
      %s59 = sphi 0, %s57
      %s60 = sphi 0, %s59
      %s74 = sphi 0, %s60
      %s78 = sphi 0, %s78
      %s80 = sphi 0, %s78
      %s81 = sphi 0, %s80
      %s95 = sphi 0, %s81
      %s99 = sphi 0, %s99
      %s101 = sphi 0, %s99
      %s102 = sphi 0, %s101
      %s116 = sphi 0, %s102
      %s120 = sphi 0, %s120
      %s122 = sphi 0, %s120
      %s123 = sphi 0, %s122
      %s137 = sphi 0, %s123
      %s141 = sphi 0, %s141
      %s143 = sphi 0, %s141
      %s144 = sphi 0, %s143
      %s158 = sphi 0, %s144
      %s162 = sphi 0, %s162
      %s164 = sphi 0, %s162
      %s165 = sphi 0, %s164
      %s179 = sphi 0, %s165
      %s185 = sphi 0, %s187
      %s188 = sphi 0, %s185
      %s189 = sphi 0, %s188
      %s205 = sphi 0, %s189
      %s209 = sphi 0, %s209
      %s211 = sphi 0, %s209
      %s212 = sphi 0, %s211
      %s226 = sphi 0, %s212
      %s232 = sphi 0, %s234
      %s235 = sphi 0, %s232
      %s236 = sphi 0, %s235
      %s252 = sphi 0, %s236
      %s258 = sphi 0, %s260
      %s261 = sphi 0, %s258
      %s262 = sphi 0, %s261
      %s278 = sphi 0, %s262
    $region4: #{tpu_custom_call.1} parent=1 // loop_header_branch
      %26 = sbr.rel (%p24) target = $region8
    $region5: #{tpu_custom_call.1} parent=1 // loop_body
      %s28 = ssub.s32 %s23, 1
      %s29 = ssub.s32 %s23, 2
      %s30 = sadd.s32 %s23, 1
      %s31 = ssub.s32 %s23, %s30
      %p32 = scmp.eq.s32.totalorder %s31, 0
      %s34 = sadd.s32 %s33, 1
      %s35 = scalar_select %p32, %s33, %s34
      %p38 = pneg %p32
      %p39 = scmp.eq.s32.totalorder %s23, 1
      %p40 = por %p38, %p39
      %p41 = scmp.ne.s32.totalorder %s33, %s36
      %p42 = scmp.eq.s32.totalorder %s23, 0
      %p43 = por %p41, %p42
      %p44 = scmp.ne.s32.totalorder %s33, %s36
      %p45 = scmp.eq.s32.totalorder %s28, 1
      %p46 = por %p44, %p45
      %p47 = scmp.ne.s32.totalorder %s36, %s37
      %p48 = scmp.eq.s32.totalorder %s28, 0
      %p49 = por %p47, %p48
      %p50 = scmp.ne.s32.totalorder %s36, %s37
      %p51 = scmp.eq.s32.totalorder %s29, 1
      %p52 = por %p50, %p51
      %p54 = scmp.ne.s32.totalorder %s37, %s53
      %p55 = scmp.eq.s32.totalorder %s29, 0
      %p56 = por %p54, %p55
      %s58 = sadd.s32 %s57, 1
      %p61 = scmp.eq.s32.totalorder %s23, 1
      %p62 = scmp.ne.s32.totalorder %s57, %s59
      %p63 = scmp.eq.s32.totalorder %s23, 0
      %p64 = por %p62, %p63
      %p65 = scmp.ne.s32.totalorder %s57, %s59
      %p66 = scmp.eq.s32.totalorder %s28, 1
      %p67 = por %p65, %p66
      %p68 = scmp.ne.s32.totalorder %s59, %s60
      %p69 = scmp.eq.s32.totalorder %s28, 0
      %p70 = por %p68, %p69
      %p71 = scmp.ne.s32.totalorder %s59, %s60
      %p72 = scmp.eq.s32.totalorder %s29, 1
      %p73 = por %p71, %p72
      %p75 = scmp.ne.s32.totalorder %s60, %s74
      %p76 = scmp.eq.s32.totalorder %s29, 0
      %p77 = por %p75, %p76
      %s79 = sadd.s32 %s78, 1
      %p82 = scmp.eq.s32.totalorder %s23, 1
      %p83 = scmp.ne.s32.totalorder %s78, %s80
      %p84 = scmp.eq.s32.totalorder %s23, 0
      %p85 = por %p83, %p84
      %p86 = scmp.ne.s32.totalorder %s78, %s80
      %p87 = scmp.eq.s32.totalorder %s28, 1
      %p88 = por %p86, %p87
      %p89 = scmp.ne.s32.totalorder %s80, %s81
      %p90 = scmp.eq.s32.totalorder %s28, 0
      %p91 = por %p89, %p90
      %p92 = scmp.ne.s32.totalorder %s80, %s81
      %p93 = scmp.eq.s32.totalorder %s29, 1
      %p94 = por %p92, %p93
      %p96 = scmp.ne.s32.totalorder %s81, %s95
      %p97 = scmp.eq.s32.totalorder %s29, 0
      %p98 = por %p96, %p97
      %s100 = sadd.s32 %s99, 1
      %p103 = scmp.eq.s32.totalorder %s23, 1
      %p104 = scmp.ne.s32.totalorder %s99, %s101
      %p105 = scmp.eq.s32.totalorder %s23, 0
      %p106 = por %p104, %p105
      %p107 = scmp.ne.s32.totalorder %s99, %s101
      %p108 = scmp.eq.s32.totalorder %s28, 1
      %p109 = por %p107, %p108
      %p110 = scmp.ne.s32.totalorder %s101, %s102
      %p111 = scmp.eq.s32.totalorder %s28, 0
      %p112 = por %p110, %p111
      %p113 = scmp.ne.s32.totalorder %s101, %s102
      %p114 = scmp.eq.s32.totalorder %s29, 1
      %p115 = por %p113, %p114
      %p117 = scmp.ne.s32.totalorder %s102, %s116
      %p118 = scmp.eq.s32.totalorder %s29, 0
      %p119 = por %p117, %p118
      %s121 = sadd.s32 %s120, 1
      %p124 = scmp.eq.s32.totalorder %s23, 1
      %p125 = scmp.ne.s32.totalorder %s120, %s122
      %p126 = scmp.eq.s32.totalorder %s23, 0
      %p127 = por %p125, %p126
      %p128 = scmp.ne.s32.totalorder %s120, %s122
      %p129 = scmp.eq.s32.totalorder %s28, 1
      %p130 = por %p128, %p129
      %p131 = scmp.ne.s32.totalorder %s122, %s123
      %p132 = scmp.eq.s32.totalorder %s28, 0
      %p133 = por %p131, %p132
      %p134 = scmp.ne.s32.totalorder %s122, %s123
      %p135 = scmp.eq.s32.totalorder %s29, 1
      %p136 = por %p134, %p135
      %p138 = scmp.ne.s32.totalorder %s123, %s137
      %p139 = scmp.eq.s32.totalorder %s29, 0
      %p140 = por %p138, %p139
      %s142 = sadd.s32 %s141, 1
      %p145 = scmp.eq.s32.totalorder %s23, 1
      %p146 = scmp.ne.s32.totalorder %s141, %s143
      %p147 = scmp.eq.s32.totalorder %s23, 0
      %p148 = por %p146, %p147
      %p149 = scmp.ne.s32.totalorder %s141, %s143
      %p150 = scmp.eq.s32.totalorder %s28, 1
      %p151 = por %p149, %p150
      %p152 = scmp.ne.s32.totalorder %s143, %s144
      %p153 = scmp.eq.s32.totalorder %s28, 0
      %p154 = por %p152, %p153
      %p155 = scmp.ne.s32.totalorder %s143, %s144
      %p156 = scmp.eq.s32.totalorder %s29, 1
      %p157 = por %p155, %p156
      %p159 = scmp.ne.s32.totalorder %s144, %s158
      %p160 = scmp.eq.s32.totalorder %s29, 0
      %p161 = por %p159, %p160
      %s163 = sadd.s32 %s162, 1
      %p166 = scmp.eq.s32.totalorder %s23, 1
      %p167 = scmp.ne.s32.totalorder %s162, %s164
      %p168 = scmp.eq.s32.totalorder %s23, 0
      %p169 = por %p167, %p168
      %p170 = scmp.ne.s32.totalorder %s162, %s164
      %p171 = scmp.eq.s32.totalorder %s28, 1
      %p172 = por %p170, %p171
      %p173 = scmp.ne.s32.totalorder %s164, %s165
      %p174 = scmp.eq.s32.totalorder %s28, 0
      %p175 = por %p173, %p174
      %p176 = scmp.ne.s32.totalorder %s164, %s165
      %p177 = scmp.eq.s32.totalorder %s29, 1
      %p178 = por %p176, %p177
      %p180 = scmp.ne.s32.totalorder %s165, %s179
      %p181 = scmp.eq.s32.totalorder %s29, 0
      %p182 = por %p180, %p181
      %s183 = ssub.s32 %s23, %s30
      %p184 = scmp.eq.s32.totalorder %s183, 0
      %s186 = sadd.s32 %s185, 1
      %s187 = scalar_select %p184, %s185, %s186
      %p190 = pneg %p184
      %p191 = scmp.eq.s32.totalorder %s23, 1
      %p192 = por %p190, %p191
      %p193 = scmp.ne.s32.totalorder %s185, %s188
      %p194 = scmp.eq.s32.totalorder %s23, 0
      %p195 = por %p193, %p194
      %p196 = scmp.ne.s32.totalorder %s185, %s188
      %p197 = scmp.eq.s32.totalorder %s28, 1
      %p198 = por %p196, %p197
      %p199 = scmp.ne.s32.totalorder %s188, %s189
      %p200 = scmp.eq.s32.totalorder %s28, 0
      %p201 = por %p199, %p200
      %p202 = scmp.ne.s32.totalorder %s188, %s189
      %p203 = scmp.eq.s32.totalorder %s29, 1
      %p204 = por %p202, %p203
      %p206 = scmp.ne.s32.totalorder %s189, %s205
      %p207 = scmp.eq.s32.totalorder %s29, 0
      %p208 = por %p206, %p207
      %s210 = sadd.s32 %s209, 1
      %p213 = scmp.eq.s32.totalorder %s23, 1
      %p214 = scmp.ne.s32.totalorder %s209, %s211
      %p215 = scmp.eq.s32.totalorder %s23, 0
      %p216 = por %p214, %p215
      %p217 = scmp.ne.s32.totalorder %s209, %s211
      %p218 = scmp.eq.s32.totalorder %s28, 1
      %p219 = por %p217, %p218
      %p220 = scmp.ne.s32.totalorder %s211, %s212
      %p221 = scmp.eq.s32.totalorder %s28, 0
      %p222 = por %p220, %p221
      %p223 = scmp.ne.s32.totalorder %s211, %s212
      %p224 = scmp.eq.s32.totalorder %s29, 1
      %p225 = por %p223, %p224
      %p227 = scmp.ne.s32.totalorder %s212, %s226
      %p228 = scmp.eq.s32.totalorder %s29, 0
      %p229 = por %p227, %p228
      %s230 = ssub.s32 %s23, %s30
      %p231 = scmp.eq.s32.totalorder %s230, 0
      %s233 = sadd.s32 %s232, 1
      %s234 = scalar_select %p231, %s232, %s233
      %p237 = pneg %p231
      %p238 = scmp.eq.s32.totalorder %s23, 1
      %p239 = por %p237, %p238
      %p240 = scmp.ne.s32.totalorder %s232, %s235
      %p241 = scmp.eq.s32.totalorder %s23, 0
      %p242 = por %p240, %p241
      %p243 = scmp.ne.s32.totalorder %s232, %s235
      %p244 = scmp.eq.s32.totalorder %s28, 1
      %p245 = por %p243, %p244
      %p246 = scmp.ne.s32.totalorder %s235, %s236
      %p247 = scmp.eq.s32.totalorder %s28, 0
      %p248 = por %p246, %p247
      %p249 = scmp.ne.s32.totalorder %s235, %s236
      %p250 = scmp.eq.s32.totalorder %s29, 1
      %p251 = por %p249, %p250
      %p253 = scmp.ne.s32.totalorder %s236, %s252
      %p254 = scmp.eq.s32.totalorder %s29, 0
      %p255 = por %p253, %p254
      %s256 = ssub.s32 %s23, %s30
      %p257 = scmp.eq.s32.totalorder %s256, 0
      %s259 = sadd.s32 %s258, 1
      %s260 = scalar_select %p257, %s258, %s259
      %p263 = pneg %p257
      %p264 = scmp.eq.s32.totalorder %s23, 1
      %p265 = por %p263, %p264
      %p266 = scmp.ne.s32.totalorder %s258, %s261
      %p267 = scmp.eq.s32.totalorder %s23, 0
      %p268 = por %p266, %p267
      %p269 = scmp.ne.s32.totalorder %s258, %s261
      %p270 = scmp.eq.s32.totalorder %s28, 1
      %p271 = por %p269, %p270
      %p272 = scmp.ne.s32.totalorder %s261, %s262
      %p273 = scmp.eq.s32.totalorder %s28, 0
      %p274 = por %p272, %p273
      %p275 = scmp.ne.s32.totalorder %s261, %s262
      %p276 = scmp.eq.s32.totalorder %s29, 1
      %p277 = por %p275, %p276
      %p279 = scmp.ne.s32.totalorder %s262, %s278
      %p280 = scmp.eq.s32.totalorder %s29, 0
      %p281 = por %p279, %p280
      %p282 = scmp.le.s32.totalorder 1, %s23
      %p283 = scmp.lt.s32.totalorder %s23, 3
      %p284 = pnand %p282, %p283
      %p285 = pneg %p284
      // Predicated region
      $region9: #{tpu_custom_call.1} parent=5 // pred_check
        _
      $region10: #{tpu_custom_call.1} parent=5 // pred_check_branch
        %287 = sbr.rel (%p284) target = $region12
      $region11: #{tpu_custom_call.1} parent=5 // pred_region
        %s288 = ssub.s32 %s23, 1
        // Predicated region
        $region13: #{tpu_custom_call.1} parent=11 // pred_check
          %p289 = pneg %p70
        $region14: #{tpu_custom_call.1} parent=11 // pred_check_branch
          %291 = sbr.rel (%p289) target = $region16
        $region15: #{tpu_custom_call.1} parent=11 // pred_region
          _
        $region16: #{tpu_custom_call.1} parent=11 // pred_fallthru
          _
        // Predicated region
        $region17: #{tpu_custom_call.1} parent=11 // pred_check
          %p292 = pneg %p91
        $region18: #{tpu_custom_call.1} parent=11 // pred_check_branch
          %294 = sbr.rel (%p292) target = $region20
        $region19: #{tpu_custom_call.1} parent=11 // pred_region
          _
        $region20: #{tpu_custom_call.1} parent=11 // pred_fallthru
          _
        // Predicated region
        $region21: #{tpu_custom_call.1} parent=11 // pred_check
          %p295 = pneg %p112
        $region22: #{tpu_custom_call.1} parent=11 // pred_check_branch
          %297 = sbr.rel (%p295) target = $region24
        $region23: #{tpu_custom_call.1} parent=11 // pred_region
          _
        $region24: #{tpu_custom_call.1} parent=11 // pred_fallthru
          _
        // Predicated region
        $region25: #{tpu_custom_call.1} parent=11 // pred_check
          %p298 = pneg %p133
        $region26: #{tpu_custom_call.1} parent=11 // pred_check_branch
          %300 = sbr.rel (%p298) target = $region28
        $region27: #{tpu_custom_call.1} parent=11 // pred_region
          _
        $region28: #{tpu_custom_call.1} parent=11 // pred_fallthru
          _
        // Predicated region
        $region29: #{tpu_custom_call.1} parent=11 // pred_check
          %p301 = pneg %p154
        $region30: #{tpu_custom_call.1} parent=11 // pred_check_branch
          %303 = sbr.rel (%p301) target = $region32
        $region31: #{tpu_custom_call.1} parent=11 // pred_region
          _
        $region32: #{tpu_custom_call.1} parent=11 // pred_fallthru
          _
        // Predicated region
        $region33: #{tpu_custom_call.1} parent=11 // pred_check
          %p304 = pneg %p175
        $region34: #{tpu_custom_call.1} parent=11 // pred_check_branch
          %306 = sbr.rel (%p304) target = $region36
        $region35: #{tpu_custom_call.1} parent=11 // pred_region
          _
        $region36: #{tpu_custom_call.1} parent=11 // pred_fallthru
          _
        // Predicated region
        $region37: #{tpu_custom_call.1} parent=11 // pred_check
          %p307 = pneg %p222
        $region38: #{tpu_custom_call.1} parent=11 // pred_check_branch
          %309 = sbr.rel (%p307) target = $region40
        $region39: #{tpu_custom_call.1} parent=11 // pred_region
          _
        $region40: #{tpu_custom_call.1} parent=11 // pred_fallthru
          _
      $region12: #{tpu_custom_call.1} parent=5 // pred_fallthru
        _
      %p310 = scmp.lt.s32.totalorder %s23, 2
      // Predicated region
      $region41: #{tpu_custom_call.1} parent=5 // pred_check
        %p311 = pneg %p310
      $region42: #{tpu_custom_call.1} parent=5 // pred_check_branch
        %313 = sbr.rel (%p311) target = $region44
      $region43: #{tpu_custom_call.1} parent=5 // pred_region
        // Predicated region
        $region45: #{tpu_custom_call.1} parent=43 // pred_check
          %p314 = pneg %p43
        $region46: #{tpu_custom_call.1} parent=43 // pred_check_branch
          %316 = sbr.rel (%p314) target = $region48
        $region47: #{tpu_custom_call.1} parent=43 // pred_region
          %s317 = smul.u32 2, %s23
          %p318 = scmp.lt.s32.totalorder %s317, 3
          %s319 = scalar_select %p318, %s317, 3
          %s320 = smul.addr %s319, 2
          %s321 = smul.addr %s320, 8
          %s322 = scalar_lea.vmem %s0, %s321
          %s323 = smul.u32 2, %s23
        $region48: #{tpu_custom_call.1} parent=43 // pred_fallthru
          _
        // Predicated region
        $region49: #{tpu_custom_call.1} parent=43 // pred_check
          %p324 = pneg %p195
        $region50: #{tpu_custom_call.1} parent=43 // pred_check_branch
          %326 = sbr.rel (%p324) target = $region52
        $region51: #{tpu_custom_call.1} parent=43 // pred_region
          %s327 = smul.u32 2, %s23
          %p328 = scmp.lt.s32.totalorder %s327, 3
          %s329 = scalar_select %p328, %s327, 3
          %s330 = smul.addr %s329, 2
          %s331 = smul.addr %s330, 8
          %s332 = scalar_lea.vmem %s7, %s331
          %s333 = smul.u32 2, %s23
        $region52: #{tpu_custom_call.1} parent=43 // pred_fallthru
          _
      $region44: #{tpu_custom_call.1} parent=5 // pred_fallthru
        _
      %p334 = scmp.le.s32.totalorder 1, %s23
      %p335 = scmp.lt.s32.totalorder %s23, 3
      %p336 = pnand %p334, %p335
      %p337 = pneg %p336
      // Predicated region
      $region53: #{tpu_custom_call.1} parent=5 // pred_check
        _
      $region54: #{tpu_custom_call.1} parent=5 // pred_check_branch
        %339 = sbr.rel (%p336) target = $region56
      $region55: #{tpu_custom_call.1} parent=5 // pred_region
        %s340 = ssub.s32 %s23, 1
        %s341 = smul.u32 2, %s28
        %p342 = scmp.lt.s32.totalorder %s341, 3
        %s343 = scalar_select %p342, %s341, 3
        %s344 = smul.addr %s343, 2
        %s345 = smul.addr %s344, 8
        %s346 = scalar_lea.vmem %s0, %s345
        %p347 = pneg %p49
        %p348 = pneg %p46
        %p349 = pneg %p70
        %p350 = pneg %p67
        %p351 = pneg %p91
        %p352 = pneg %p88
        %p353 = pneg %p112
        %p354 = pneg %p109
        %p355 = pneg %p133
        %p356 = pneg %p130
        %p357 = pneg %p154
        %p358 = pneg %p151
        %p359 = pneg %p175
        %p360 = pneg %p172
        %s361 = smul.u32 2, %s28
        %p362 = scmp.lt.s32.totalorder %s361, 3
        %s363 = scalar_select %p362, %s361, 3
        %s364 = smul.addr %s363, 2
        %s365 = smul.addr %s364, 8
        %s366 = scalar_lea.vmem %s7, %s365
        %p367 = pneg %p201
        %p368 = pneg %p198
        %p369 = pneg %p222
        %p370 = pneg %p219
        %p371 = pneg %p248
        %p372 = pneg %p245
        %s373 = sand.u32 %s235, 1
        %s374 = scalar_lea.sflag [#allocation3], %s373
        %s375 = sand.u32 %s235, 1
        %s376 = smul.addr %s375, 32
        %s377 = scalar_lea.vmem [#allocation2], %s376
        %p378 = pneg %p274
        %p379 = pneg %p271
        %s380 = sand.u32 %s261, 1
        %s381 = scalar_lea.sflag [#allocation5], %s380
        %s382 = sand.u32 %s261, 1
        %s383 = smul.addr %s382, 128
        %s384 = scalar_lea.vmem [#allocation4], %s383
        %s385 = smul.u32 2, %s28
        %p386 = scmp.lt.s32.totalorder %s385, 3
        %s387 = scalar_select %p386, %s385, 3
        %s388 = smul.addr %s387, 2
        %s389 = smul.addr %s388, 8
        %s390 = scalar_lea.vmem %s0, %s389
        %s391 = smul.u32 2, %s28
        %s392 = smul.u32 2, %s28
        %p393 = scmp.lt.s32.totalorder %s392, 3
        %s394 = scalar_select %p393, %s392, 3
        %s395 = smul.addr %s394, 2
        %s396 = smul.addr %s395, 8
        %s397 = scalar_lea.vmem %s7, %s396
        %s398 = smul.u32 2, %s28
        %s399 = smul.u32 2, %s28
        %s400 = smul.u32 2, %s28
        %v401 = vld [vmem:[%s390] sm:$0xff]
        %v402 = vld [vmem:[%s390 + $0x8] sm:$0xff]
        %v403 = vld [vmem:[%s390 + $0x10] sm:$0xff]
        %v404 = vld [vmem:[%s390 + $0x18] sm:$0xff]
        %v405 = vld [vmem:[%s397] sm:$0xff]
        %v406 = vld [vmem:[%s397 + $0x8] sm:$0xff]
        %v407 = vld [vmem:[%s397 + $0x10] sm:$0xff]
        %v408 = vld [vmem:[%s397 + $0x18] sm:$0xff]
        %vm409 = vcmp.eq.f32.partialorder %v405, 0.0
        %vm410 = vcmp.eq.f32.partialorder %v406, 0.0
        %vm411 = vcmp.eq.f32.partialorder %v407, 0.0
        %vm412 = vcmp.eq.f32.partialorder %v408, 0.0
        %v413 = vld [vmem:[%s8] sm:$0xff]
        %v414 = vld [vmem:[%s8 + $0x8] sm:$0xff]
        %v415 = vld [vmem:[%s1] sm:$0xff]
        %v416 = vld [vmem:[%s1 + $0x8] sm:$0xff]
        %v417 = vld [vmem:[%s1 + $0x10] sm:$0xff]
        %v418 = vld [vmem:[%s1 + $0x18] sm:$0xff]
        %v419 = vld [vmem:[%s2] sm:$0x1]
        %v421 = vperm.slane %v419, 0
        %vm423 = vcmask 261120
        %v425 = vsel %vm423, %v401, 0
        %v428 = vsel %vm423, %v402, 0
        %v431 = vsel %vm423, %v403, 0
        %v434 = vsel %vm423, %v404, 0
        %436 = vmatpush.msra.mxu0 0.0
        %437 = vmatpush.msra.mxu0 0.0
        %438 = vmatpush.msra.mxu0 0.0
        %439 = vmatpush.msra.mxu0 0.0
        %440 = vmatpush.msra.mxu0 0.0
        %441 = vmatpush.msra.mxu0 0.0
        %442 = vmatpush.msra.mxu0 0.0
        %443 = vmatpush.msra.mxu0 0.0
        %444 = vmatpush.msra.mxu0 0.0
        %445 = vmatpush.msra.mxu0 0.0
        %446 = vmatpush.msra.mxu0 0.0
        %447 = vmatpush.msra.mxu0 0.0
        %448 = vmatpush.msra.mxu0 %v418
        %449 = vmatpush.msra.mxu0 %v417
        %450 = vmatpush.msra.mxu0 %v416
        %451 = vmatpush.msra.mxu0 %v415
        %452 = vmatmul.f32.gmra.mxu0 %v425
        %v453 = vpop.f32.mrf.mxu0
        %v454 = vadd.f32 %v421, %v453
        %455 = vmatmul.f32.gmra.mxu0 %v428
        %v456 = vpop.f32.mrf.mxu0
        %v457 = vadd.f32 %v421, %v456
        %458 = vmatmul.f32.gmra.mxu0 %v431
        %v459 = vpop.f32.mrf.mxu0
        %v460 = vadd.f32 %v421, %v459
        %461 = vmatmul.f32.gmra.mxu0 %v434
        %v462 = vpop.f32.mrf.mxu0
        %v463 = vadd.f32 %v421, %v462
        %464 = vdwg.mxu0
        %v465 = vld [vmem:[%s3] sm:$0xff]
        %v466 = vld [vmem:[%s3 + $0x8] sm:$0xff]
        %v467 = vld [vmem:[%s3 + $0x10] sm:$0xff]
        %v468 = vld [vmem:[%s3 + $0x18] sm:$0xff]
        %v469 = vld [vmem:[%s4] sm:$0x1]
        %v471 = vperm.slane %v469, 0
        %473 = vmatpush.msra.mxu0 0.0
        %474 = vmatpush.msra.mxu0 0.0
        %475 = vmatpush.msra.mxu0 0.0
        %476 = vmatpush.msra.mxu0 0.0
        %477 = vmatpush.msra.mxu0 0.0
        %478 = vmatpush.msra.mxu0 0.0
        %479 = vmatpush.msra.mxu0 0.0
        %480 = vmatpush.msra.mxu0 0.0
        %481 = vmatpush.msra.mxu0 0.0
        %482 = vmatpush.msra.mxu0 0.0
        %483 = vmatpush.msra.mxu0 0.0
        %484 = vmatpush.msra.mxu0 0.0
        %485 = vmatpush.msra.mxu0 %v468
        %486 = vmatpush.msra.mxu0 %v467
        %487 = vmatpush.msra.mxu0 %v466
        %488 = vmatpush.msra.mxu0 %v465
        %489 = vmatmul.f32.gmra.mxu0 %v425
        %v490 = vpop.f32.mrf.mxu0
        %v491 = vadd.f32 %v471, %v490
        %492 = vmatmul.f32.gmra.mxu0 %v428
        %v493 = vpop.f32.mrf.mxu0
        %v494 = vadd.f32 %v471, %v493
        %495 = vmatmul.f32.gmra.mxu0 %v431
        %v496 = vpop.f32.mrf.mxu0
        %v497 = vadd.f32 %v471, %v496
        %498 = vmatmul.f32.gmra.mxu0 %v434
        %v499 = vpop.f32.mrf.mxu0
        %v500 = vadd.f32 %v471, %v499
        %501 = vdwg.mxu0
        %v502 = vld [vmem:[%s5] sm:$0xff]
        %v503 = vld [vmem:[%s5 + $0x8] sm:$0xff]
        %v504 = vld [vmem:[%s5 + $0x10] sm:$0xff]
        %v505 = vld [vmem:[%s5 + $0x18] sm:$0xff]
        %v506 = vld [vmem:[%s6] sm:$0x1]
        %v508 = vperm.slane %v506, 0
        %510 = vmatpush.msra.mxu0 0.0
        %511 = vmatpush.msra.mxu0 0.0
        %512 = vmatpush.msra.mxu0 0.0
        %513 = vmatpush.msra.mxu0 0.0
        %514 = vmatpush.msra.mxu0 0.0
        %515 = vmatpush.msra.mxu0 0.0
        %516 = vmatpush.msra.mxu0 0.0
        %517 = vmatpush.msra.mxu0 0.0
        %518 = vmatpush.msra.mxu0 0.0
        %519 = vmatpush.msra.mxu0 0.0
        %520 = vmatpush.msra.mxu0 0.0
        %521 = vmatpush.msra.mxu0 0.0
        %522 = vmatpush.msra.mxu0 %v505
        %523 = vmatpush.msra.mxu0 %v504
        %524 = vmatpush.msra.mxu0 %v503
        %525 = vmatpush.msra.mxu0 %v502
        %526 = vmatmul.f32.gmra.mxu0 %v425
        %v527 = vpop.f32.mrf.mxu0
        %v528 = vadd.f32 %v508, %v527
        %529 = vmatmul.f32.gmra.mxu0 %v428
        %v530 = vpop.f32.mrf.mxu0
        %v531 = vadd.f32 %v508, %v530
        %532 = vmatmul.f32.gmra.mxu0 %v431
        %v533 = vpop.f32.mrf.mxu0
        %v534 = vadd.f32 %v508, %v533
        %535 = vmatmul.f32.gmra.mxu0 %v434
        %v536 = vpop.f32.mrf.mxu0
        %v537 = vadd.f32 %v508, %v536
        %538 = vdwg.mxu0
        %vm539 = vcmask 64512
        %v541 = vsel %vm539, %v454, 0
        %v544 = vsel %vm539, %v457, 0
        %v547 = vsel %vm539, %v491, 0
        %v550 = vsel %vm539, %v494, 0
        %552 = vmatpush.xpose.msra.mxu0 0.0
        %553 = vmatpush.xpose.msra.mxu0 0.0
        %554 = vmatpush.xpose.msra.mxu0 0.0
        %555 = vmatpush.xpose.msra.mxu0 0.0
        %556 = vmatpush.xpose.msra.mxu0 0.0
        %557 = vmatpush.xpose.msra.mxu0 0.0
        %558 = vmatpush.xpose.msra.mxu0 0.0
        %559 = vmatpush.xpose.msra.mxu0 0.0
        %560 = vmatpush.xpose.msra.mxu0 0.0
        %561 = vmatpush.xpose.msra.mxu0 0.0
        %562 = vmatpush.xpose.msra.mxu0 0.0
        %563 = vmatpush.xpose.msra.mxu0 0.0
        %564 = vmatpush.xpose.msra.mxu0 0.0
        %565 = vmatpush.xpose.msra.mxu0 0.0
        %566 = vmatpush.xpose.msra.mxu0 %v550
        %567 = vmatpush.xpose.msra.mxu0 %v547
        %568 = vmatmul.f32.gmra.mxu0 %v541
        %v569 = vpop.f32.mrf.mxu0
        %v570 = vadd.f32 %v413, %v569
        %571 = vmatmul.f32.gmra.mxu0 %v544
        %v572 = vpop.f32.mrf.mxu0
        %v573 = vadd.f32 %v414, %v572
        %574 = vdwg.mxu0
        %v576 = vsel %vm539, %v460, 0
        %v579 = vsel %vm539, %v463, 0
        %v582 = vsel %vm539, %v497, 0
        %v585 = vsel %vm539, %v500, 0
        %587 = vmatpush.xpose.msra.mxu0 0.0
        %588 = vmatpush.xpose.msra.mxu0 0.0
        %589 = vmatpush.xpose.msra.mxu0 0.0
        %590 = vmatpush.xpose.msra.mxu0 0.0
        %591 = vmatpush.xpose.msra.mxu0 0.0
        %592 = vmatpush.xpose.msra.mxu0 0.0
        %593 = vmatpush.xpose.msra.mxu0 0.0
        %594 = vmatpush.xpose.msra.mxu0 0.0
        %595 = vmatpush.xpose.msra.mxu0 0.0
        %596 = vmatpush.xpose.msra.mxu0 0.0
        %597 = vmatpush.xpose.msra.mxu0 0.0
        %598 = vmatpush.xpose.msra.mxu0 0.0
        %599 = vmatpush.xpose.msra.mxu0 0.0
        %600 = vmatpush.xpose.msra.mxu0 0.0
        %601 = vmatpush.xpose.msra.mxu0 %v585
        %602 = vmatpush.xpose.msra.mxu0 %v582
        %603 = vmatmul.f32.gmra.mxu0 %v576
        %v604 = vpop.f32.mrf.mxu0
        %v605 = vadd.f32 %v413, %v604
        %606 = vmatmul.f32.gmra.mxu0 %v579
        %v607 = vpop.f32.mrf.mxu0
        %v608 = vadd.f32 %v414, %v607
        %609 = vdwg.mxu0
        %v610 = vsel %vm409, -1e+10, %v570
        %v611 = vsel %vm410, -1e+10, %v573
        %v612 = vsel %vm411, -1e+10, %v605
        %v613 = vsel %vm412, -1e+10, %v608
        %vm614 = vcmask 130048
        %v615 = vsel %vm614, %v610, -inf
        %616 = vmax.xlane.f32.xlu0 %v615
        %v617 = vpop.xlane.xlu0 %616
        %v618 = vsel %vm614, %v611, -inf
        %619 = vmax.xlane.f32.xlu0 %v618
        %v620 = vpop.xlane.xlu0 %619
        %v621 = vsel %vm614, %v612, -inf
        %622 = vmax.xlane.f32.xlu0 %v621
        %v623 = vpop.xlane.xlu0 %622
        %v624 = vsel %vm614, %v613, -inf
        %625 = vmax.xlane.f32.xlu0 %v624
        %v626 = vpop.xlane.xlu0 %625
        %v627 = vsub.f32 %v610, %v617
        %v628 = vsub.f32 %v611, %v620
        %v629 = vsub.f32 %v612, %v623
        %v630 = vsub.f32 %v613, %v626
        %v631 = vmul.f32 %v627, 1.442695
        %v632 = vpow.pop %v631
        %v633 = vmul.f32 %v628, 1.442695
        %v634 = vpow.pop %v633
        %v635 = vmul.f32 %v629, 1.442695
        %v636 = vpow.pop %v635
        %v637 = vmul.f32 %v630, 1.442695
        %v638 = vpow.pop %v637
        %v639 = vsel %vm614, %v632, 0.0
        %640 = vadd.xlane.f32.xlu0 %v639
        %v641 = vpop.xlane.xlu0 %640
        %v642 = vsel %vm614, %v634, 0.0
        %643 = vadd.xlane.f32.xlu0 %v642
        %v644 = vpop.xlane.xlu0 %643
        %v645 = vsel %vm614, %v636, 0.0
        %646 = vadd.xlane.f32.xlu0 %v645
        %v647 = vpop.xlane.xlu0 %646
        %v648 = vsel %vm614, %v638, 0.0
        %649 = vadd.xlane.f32.xlu0 %v648
        %v650 = vpop.xlane.xlu0 %649
        %v651 = vrcp.pop %v641
        %v652 = vmul.f32 %v641, %v651
        %v653 = vsub.f32 1.0, %v652
        %v654 = vmul.f32 %v651, %v653
        %v655 = vadd.f32 %v651, %v654
        %vm656 = vweird.f32 %v641
        %vm657 = vweird.f32 %v651
        %vm658 = vmor %vm656, %vm657
        %v659 = vsel %vm658, %v651, %v655
        %v660 = vand.u32 2147483647, %v641
        %vm661 = vcmp.eq.f32.partialorder %v660, 8.507059e+37
        %v662 = vand.u32 %v641, 2147483648
        %v663 = vor.u32 1.1754944e-38, %v662
        %v664 = vsel %vm661, %v663, %v659
        %v665 = vrcp.pop %v644
        %v666 = vmul.f32 %v644, %v665
        %v667 = vsub.f32 1.0, %v666
        %v668 = vmul.f32 %v665, %v667
        %v669 = vadd.f32 %v665, %v668
        %vm670 = vweird.f32 %v644
        %vm671 = vweird.f32 %v665
        %vm672 = vmor %vm670, %vm671
        %v673 = vsel %vm672, %v665, %v669
        %v674 = vand.u32 2147483647, %v644
        %vm675 = vcmp.eq.f32.partialorder %v674, 8.507059e+37
        %v676 = vand.u32 %v644, 2147483648
        %v677 = vor.u32 1.1754944e-38, %v676
        %v678 = vsel %vm675, %v677, %v673
        %v679 = vrcp.pop %v647
        %v680 = vmul.f32 %v647, %v679
        %v681 = vsub.f32 1.0, %v680
        %v682 = vmul.f32 %v679, %v681
        %v683 = vadd.f32 %v679, %v682
        %vm684 = vweird.f32 %v647
        %vm685 = vweird.f32 %v679
        %vm686 = vmor %vm684, %vm685
        %v687 = vsel %vm686, %v679, %v683
        %v688 = vand.u32 2147483647, %v647
        %vm689 = vcmp.eq.f32.partialorder %v688, 8.507059e+37
        %v690 = vand.u32 %v647, 2147483648
        %v691 = vor.u32 1.1754944e-38, %v690
        %v692 = vsel %vm689, %v691, %v687
        %v693 = vrcp.pop %v650
        %v694 = vmul.f32 %v650, %v693
        %v695 = vsub.f32 1.0, %v694
        %v696 = vmul.f32 %v693, %v695
        %v697 = vadd.f32 %v693, %v696
        %vm698 = vweird.f32 %v650
        %vm699 = vweird.f32 %v693
        %vm700 = vmor %vm698, %vm699
        %v701 = vsel %vm700, %v693, %v697
        %v702 = vand.u32 2147483647, %v650
        %vm703 = vcmp.eq.f32.partialorder %v702, 8.507059e+37
        %v704 = vand.u32 %v650, 2147483648
        %v705 = vor.u32 1.1754944e-38, %v704
        %v706 = vsel %vm703, %v705, %v701
        %v707 = vmul.f32 %v632, %v664
        %v708 = vmul.f32 %v634, %v678
        %v709 = vmul.f32 %v636, %v692
        %v710 = vmul.f32 %v638, %v706
        %v712 = vsel %vm614, %v707, 0
        %v715 = vsel %vm614, %v708, 0
        %717 = vmatpush.msra.mxu0 0.0
        %718 = vmatpush.msra.mxu0 0.0
        %719 = vmatpush.msra.mxu0 0.0
        %720 = vmatpush.msra.mxu0 0.0
        %721 = vmatpush.msra.mxu0 0.0
        %722 = vmatpush.msra.mxu0 0.0
        %723 = vmatpush.msra.mxu0 0.0
        %724 = vmatpush.msra.mxu0 0.0
        %725 = vmatpush.msra.mxu0 0.0
        %726 = vmatpush.msra.mxu0 0.0
        %727 = vmatpush.msra.mxu0 0.0
        %728 = vmatpush.msra.mxu0 0.0
        %729 = vmatpush.msra.mxu0 0.0
        %730 = vmatpush.msra.mxu0 0.0
        %731 = vmatpush.msra.mxu0 %v531
        %732 = vmatpush.msra.mxu0 %v528
        %733 = vmatmul.f32.gmra.mxu0 %v712
        %v734 = vpop.f32.mrf.mxu0
        %v735 = vadd.f32 0.0, %v734
        %736 = vmatmul.f32.gmra.mxu0 %v715
        %v737 = vpop.f32.mrf.mxu0
        %v738 = vadd.f32 0.0, %v737
        %739 = vdwg.mxu0
        %v741 = vsel %vm614, %v709, 0
        %v744 = vsel %vm614, %v710, 0
        %746 = vmatpush.msra.mxu0 0.0
        %747 = vmatpush.msra.mxu0 0.0
        %748 = vmatpush.msra.mxu0 0.0
        %749 = vmatpush.msra.mxu0 0.0
        %750 = vmatpush.msra.mxu0 0.0
        %751 = vmatpush.msra.mxu0 0.0
        %752 = vmatpush.msra.mxu0 0.0
        %753 = vmatpush.msra.mxu0 0.0
        %754 = vmatpush.msra.mxu0 0.0
        %755 = vmatpush.msra.mxu0 0.0
        %756 = vmatpush.msra.mxu0 0.0
        %757 = vmatpush.msra.mxu0 0.0
        %758 = vmatpush.msra.mxu0 0.0
        %759 = vmatpush.msra.mxu0 0.0
        %760 = vmatpush.msra.mxu0 %v537
        %761 = vmatpush.msra.mxu0 %v534
        %762 = vmatmul.f32.gmra.mxu0 %v741
        %v763 = vpop.f32.mrf.mxu0
        %v764 = vadd.f32 0.0, %v763
        %765 = vmatmul.f32.gmra.mxu0 %v744
        %v766 = vpop.f32.mrf.mxu0
        %v767 = vadd.f32 0.0, %v766
        %768 = vdwg.mxu0
        %s769 = scalar_lea.vmem %s1, 32
        %v770 = vld [vmem:[%s769] sm:$0xff]
        %v771 = vld [vmem:[%s769 + $0x8] sm:$0xff]
        %v772 = vld [vmem:[%s769 + $0x10] sm:$0xff]
        %v773 = vld [vmem:[%s769 + $0x18] sm:$0xff]
        %s774 = scalar_lea.vmem %s2, 1
        %v775 = vld [vmem:[%s774] sm:$0x1]
        %v777 = vperm.slane %v775, 0
        %779 = vmatpush.msra.mxu0 0.0
        %780 = vmatpush.msra.mxu0 0.0
        %781 = vmatpush.msra.mxu0 0.0
        %782 = vmatpush.msra.mxu0 0.0
        %783 = vmatpush.msra.mxu0 0.0
        %784 = vmatpush.msra.mxu0 0.0
        %785 = vmatpush.msra.mxu0 0.0
        %786 = vmatpush.msra.mxu0 0.0
        %787 = vmatpush.msra.mxu0 0.0
        %788 = vmatpush.msra.mxu0 0.0
        %789 = vmatpush.msra.mxu0 0.0
        %790 = vmatpush.msra.mxu0 0.0
        %791 = vmatpush.msra.mxu0 %v773
        %792 = vmatpush.msra.mxu0 %v772
        %793 = vmatpush.msra.mxu0 %v771
        %794 = vmatpush.msra.mxu0 %v770
        %795 = vmatmul.f32.gmra.mxu0 %v425
        %v796 = vpop.f32.mrf.mxu0
        %v797 = vadd.f32 %v777, %v796
        %798 = vmatmul.f32.gmra.mxu0 %v428
        %v799 = vpop.f32.mrf.mxu0
        %v800 = vadd.f32 %v777, %v799
        %801 = vmatmul.f32.gmra.mxu0 %v431
        %v802 = vpop.f32.mrf.mxu0
        %v803 = vadd.f32 %v777, %v802
        %804 = vmatmul.f32.gmra.mxu0 %v434
        %v805 = vpop.f32.mrf.mxu0
        %v806 = vadd.f32 %v777, %v805
        %807 = vdwg.mxu0
        %s808 = scalar_lea.vmem %s3, 32
        %v809 = vld [vmem:[%s808] sm:$0xff]
        %v810 = vld [vmem:[%s808 + $0x8] sm:$0xff]
        %v811 = vld [vmem:[%s808 + $0x10] sm:$0xff]
        %v812 = vld [vmem:[%s808 + $0x18] sm:$0xff]
        %s813 = scalar_lea.vmem %s4, 1
        %v814 = vld [vmem:[%s813] sm:$0x1]
        %v816 = vperm.slane %v814, 0
        %818 = vmatpush.msra.mxu0 0.0
        %819 = vmatpush.msra.mxu0 0.0
        %820 = vmatpush.msra.mxu0 0.0
        %821 = vmatpush.msra.mxu0 0.0
        %822 = vmatpush.msra.mxu0 0.0
        %823 = vmatpush.msra.mxu0 0.0
        %824 = vmatpush.msra.mxu0 0.0
        %825 = vmatpush.msra.mxu0 0.0
        %826 = vmatpush.msra.mxu0 0.0
        %827 = vmatpush.msra.mxu0 0.0
        %828 = vmatpush.msra.mxu0 0.0
        %829 = vmatpush.msra.mxu0 0.0
        %830 = vmatpush.msra.mxu0 %v812
        %831 = vmatpush.msra.mxu0 %v811
        %832 = vmatpush.msra.mxu0 %v810
        %833 = vmatpush.msra.mxu0 %v809
        %834 = vmatmul.f32.gmra.mxu0 %v425
        %v835 = vpop.f32.mrf.mxu0
        %v836 = vadd.f32 %v816, %v835
        %837 = vmatmul.f32.gmra.mxu0 %v428
        %v838 = vpop.f32.mrf.mxu0
        %v839 = vadd.f32 %v816, %v838
        %840 = vmatmul.f32.gmra.mxu0 %v431
        %v841 = vpop.f32.mrf.mxu0
        %v842 = vadd.f32 %v816, %v841
        %843 = vmatmul.f32.gmra.mxu0 %v434
        %v844 = vpop.f32.mrf.mxu0
        %v845 = vadd.f32 %v816, %v844
        %846 = vdwg.mxu0
        %s847 = scalar_lea.vmem %s5, 32
        %v848 = vld [vmem:[%s847] sm:$0xff]
        %v849 = vld [vmem:[%s847 + $0x8] sm:$0xff]
        %v850 = vld [vmem:[%s847 + $0x10] sm:$0xff]
        %v851 = vld [vmem:[%s847 + $0x18] sm:$0xff]
        %s852 = scalar_lea.vmem %s6, 1
        %v853 = vld [vmem:[%s852] sm:$0x1]
        %v855 = vperm.slane %v853, 0
        %857 = vmatpush.msra.mxu0 0.0
        %858 = vmatpush.msra.mxu0 0.0
        %859 = vmatpush.msra.mxu0 0.0
        %860 = vmatpush.msra.mxu0 0.0
        %861 = vmatpush.msra.mxu0 0.0
        %862 = vmatpush.msra.mxu0 0.0
        %863 = vmatpush.msra.mxu0 0.0
        %864 = vmatpush.msra.mxu0 0.0
        %865 = vmatpush.msra.mxu0 0.0
        %866 = vmatpush.msra.mxu0 0.0
        %867 = vmatpush.msra.mxu0 0.0
        %868 = vmatpush.msra.mxu0 0.0
        %869 = vmatpush.msra.mxu0 %v851
        %870 = vmatpush.msra.mxu0 %v850
        %871 = vmatpush.msra.mxu0 %v849
        %872 = vmatpush.msra.mxu0 %v848
        %873 = vmatmul.f32.gmra.mxu0 %v425
        %v874 = vpop.f32.mrf.mxu0
        %v875 = vadd.f32 %v855, %v874
        %876 = vmatmul.f32.gmra.mxu0 %v428
        %v877 = vpop.f32.mrf.mxu0
        %v878 = vadd.f32 %v855, %v877
        %879 = vmatmul.f32.gmra.mxu0 %v431
        %v880 = vpop.f32.mrf.mxu0
        %v881 = vadd.f32 %v855, %v880
        %882 = vmatmul.f32.gmra.mxu0 %v434
        %v883 = vpop.f32.mrf.mxu0
        %v884 = vadd.f32 %v855, %v883
        %885 = vdwg.mxu0
        %v887 = vsel %vm539, %v797, 0
        %v890 = vsel %vm539, %v800, 0
        %v893 = vsel %vm539, %v836, 0
        %v896 = vsel %vm539, %v839, 0
        %898 = vmatpush.xpose.msra.mxu0 0.0
        %899 = vmatpush.xpose.msra.mxu0 0.0
        %900 = vmatpush.xpose.msra.mxu0 0.0
        %901 = vmatpush.xpose.msra.mxu0 0.0
        %902 = vmatpush.xpose.msra.mxu0 0.0
        %903 = vmatpush.xpose.msra.mxu0 0.0
        %904 = vmatpush.xpose.msra.mxu0 0.0
        %905 = vmatpush.xpose.msra.mxu0 0.0
        %906 = vmatpush.xpose.msra.mxu0 0.0
        %907 = vmatpush.xpose.msra.mxu0 0.0
        %908 = vmatpush.xpose.msra.mxu0 0.0
        %909 = vmatpush.xpose.msra.mxu0 0.0
        %910 = vmatpush.xpose.msra.mxu0 0.0
        %911 = vmatpush.xpose.msra.mxu0 0.0
        %912 = vmatpush.xpose.msra.mxu0 %v896
        %913 = vmatpush.xpose.msra.mxu0 %v893
        %914 = vmatmul.f32.gmra.mxu0 %v887
        %v915 = vpop.f32.mrf.mxu0
        %v916 = vadd.f32 %v413, %v915
        %917 = vmatmul.f32.gmra.mxu0 %v890
        %v918 = vpop.f32.mrf.mxu0
        %v919 = vadd.f32 %v414, %v918
        %920 = vdwg.mxu0
        %v922 = vsel %vm539, %v803, 0
        %v925 = vsel %vm539, %v806, 0
        %v928 = vsel %vm539, %v842, 0
        %v931 = vsel %vm539, %v845, 0
        %933 = vmatpush.xpose.msra.mxu0 0.0
        %934 = vmatpush.xpose.msra.mxu0 0.0
        %935 = vmatpush.xpose.msra.mxu0 0.0
        %936 = vmatpush.xpose.msra.mxu0 0.0
        %937 = vmatpush.xpose.msra.mxu0 0.0
        %938 = vmatpush.xpose.msra.mxu0 0.0
        %939 = vmatpush.xpose.msra.mxu0 0.0
        %940 = vmatpush.xpose.msra.mxu0 0.0
        %941 = vmatpush.xpose.msra.mxu0 0.0
        %942 = vmatpush.xpose.msra.mxu0 0.0
        %943 = vmatpush.xpose.msra.mxu0 0.0
        %944 = vmatpush.xpose.msra.mxu0 0.0
        %945 = vmatpush.xpose.msra.mxu0 0.0
        %946 = vmatpush.xpose.msra.mxu0 0.0
        %947 = vmatpush.xpose.msra.mxu0 %v931
        %948 = vmatpush.xpose.msra.mxu0 %v928
        %949 = vmatmul.f32.gmra.mxu0 %v922
        %v950 = vpop.f32.mrf.mxu0
        %v951 = vadd.f32 %v413, %v950
        %952 = vmatmul.f32.gmra.mxu0 %v925
        %v953 = vpop.f32.mrf.mxu0
        %v954 = vadd.f32 %v414, %v953
        %955 = vdwg.mxu0
        %v956 = vsel %vm409, -1e+10, %v916
        %v957 = vsel %vm410, -1e+10, %v919
        %v958 = vsel %vm411, -1e+10, %v951
        %v959 = vsel %vm412, -1e+10, %v954
        %v960 = vsel %vm614, %v956, -inf
        %961 = vmax.xlane.f32.xlu0 %v960
        %v962 = vpop.xlane.xlu0 %961
        %v963 = vsel %vm614, %v957, -inf
        %964 = vmax.xlane.f32.xlu0 %v963
        %v965 = vpop.xlane.xlu0 %964
        %v966 = vsel %vm614, %v958, -inf
        %967 = vmax.xlane.f32.xlu0 %v966
        %v968 = vpop.xlane.xlu0 %967
        %v969 = vsel %vm614, %v959, -inf
        %970 = vmax.xlane.f32.xlu0 %v969
        %v971 = vpop.xlane.xlu0 %970
        %v972 = vsub.f32 %v956, %v962
        %v973 = vsub.f32 %v957, %v965
        %v974 = vsub.f32 %v958, %v968
        %v975 = vsub.f32 %v959, %v971
        %v976 = vmul.f32 %v972, 1.442695
        %v977 = vpow.pop %v976
        %v978 = vmul.f32 %v973, 1.442695
        %v979 = vpow.pop %v978
        %v980 = vmul.f32 %v974, 1.442695
        %v981 = vpow.pop %v980
        %v982 = vmul.f32 %v975, 1.442695
        %v983 = vpow.pop %v982
        %v984 = vsel %vm614, %v977, 0.0
        %985 = vadd.xlane.f32.xlu0 %v984
        %v986 = vpop.xlane.xlu0 %985
        %v987 = vsel %vm614, %v979, 0.0
        %988 = vadd.xlane.f32.xlu0 %v987
        %v989 = vpop.xlane.xlu0 %988
        %v990 = vsel %vm614, %v981, 0.0
        %991 = vadd.xlane.f32.xlu0 %v990
        %v992 = vpop.xlane.xlu0 %991
        %v993 = vsel %vm614, %v983, 0.0
        %994 = vadd.xlane.f32.xlu0 %v993
        %v995 = vpop.xlane.xlu0 %994
        %v996 = vrcp.pop %v986
        %v997 = vmul.f32 %v986, %v996
        %v998 = vsub.f32 1.0, %v997
        %v999 = vmul.f32 %v996, %v998
        %v1000 = vadd.f32 %v996, %v999
        %vm1001 = vweird.f32 %v986
        %vm1002 = vweird.f32 %v996
        %vm1003 = vmor %vm1001, %vm1002
        %v1004 = vsel %vm1003, %v996, %v1000
        %v1005 = vand.u32 2147483647, %v986
        %vm1006 = vcmp.eq.f32.partialorder %v1005, 8.507059e+37
        %v1007 = vand.u32 %v986, 2147483648
        %v1008 = vor.u32 1.1754944e-38, %v1007
        %v1009 = vsel %vm1006, %v1008, %v1004
        %v1010 = vrcp.pop %v989
        %v1011 = vmul.f32 %v989, %v1010
        %v1012 = vsub.f32 1.0, %v1011
        %v1013 = vmul.f32 %v1010, %v1012
        %v1014 = vadd.f32 %v1010, %v1013
        %vm1015 = vweird.f32 %v989
        %vm1016 = vweird.f32 %v1010
        %vm1017 = vmor %vm1015, %vm1016
        %v1018 = vsel %vm1017, %v1010, %v1014
        %v1019 = vand.u32 2147483647, %v989
        %vm1020 = vcmp.eq.f32.partialorder %v1019, 8.507059e+37
        %v1021 = vand.u32 %v989, 2147483648
        %v1022 = vor.u32 1.1754944e-38, %v1021
        %v1023 = vsel %vm1020, %v1022, %v1018
        %v1024 = vrcp.pop %v992
        %v1025 = vmul.f32 %v992, %v1024
        %v1026 = vsub.f32 1.0, %v1025
        %v1027 = vmul.f32 %v1024, %v1026
        %v1028 = vadd.f32 %v1024, %v1027
        %vm1029 = vweird.f32 %v992
        %vm1030 = vweird.f32 %v1024
        %vm1031 = vmor %vm1029, %vm1030
        %v1032 = vsel %vm1031, %v1024, %v1028
        %v1033 = vand.u32 2147483647, %v992
        %vm1034 = vcmp.eq.f32.partialorder %v1033, 8.507059e+37
        %v1035 = vand.u32 %v992, 2147483648
        %v1036 = vor.u32 1.1754944e-38, %v1035
        %v1037 = vsel %vm1034, %v1036, %v1032
        %v1038 = vrcp.pop %v995
        %v1039 = vmul.f32 %v995, %v1038
        %v1040 = vsub.f32 1.0, %v1039
        %v1041 = vmul.f32 %v1038, %v1040
        %v1042 = vadd.f32 %v1038, %v1041
        %vm1043 = vweird.f32 %v995
        %vm1044 = vweird.f32 %v1038
        %vm1045 = vmor %vm1043, %vm1044
        %v1046 = vsel %vm1045, %v1038, %v1042
        %v1047 = vand.u32 2147483647, %v995
        %vm1048 = vcmp.eq.f32.partialorder %v1047, 8.507059e+37
        %v1049 = vand.u32 %v995, 2147483648
        %v1050 = vor.u32 1.1754944e-38, %v1049
        %v1051 = vsel %vm1048, %v1050, %v1046
        %v1052 = vmul.f32 %v977, %v1009
        %v1053 = vmul.f32 %v979, %v1023
        %v1054 = vmul.f32 %v981, %v1037
        %v1055 = vmul.f32 %v983, %v1051
        %v1057 = vsel %vm614, %v1052, 0
        %v1060 = vsel %vm614, %v1053, 0
        %1062 = vmatpush.msra.mxu0 0.0
        %1063 = vmatpush.msra.mxu0 0.0
        %1064 = vmatpush.msra.mxu0 0.0
        %1065 = vmatpush.msra.mxu0 0.0
        %1066 = vmatpush.msra.mxu0 0.0
        %1067 = vmatpush.msra.mxu0 0.0
        %1068 = vmatpush.msra.mxu0 0.0
        %1069 = vmatpush.msra.mxu0 0.0
        %1070 = vmatpush.msra.mxu0 0.0
        %1071 = vmatpush.msra.mxu0 0.0
        %1072 = vmatpush.msra.mxu0 0.0
        %1073 = vmatpush.msra.mxu0 0.0
        %1074 = vmatpush.msra.mxu0 0.0
        %1075 = vmatpush.msra.mxu0 0.0
        %1076 = vmatpush.msra.mxu0 %v878
        %1077 = vmatpush.msra.mxu0 %v875
        %1078 = vmatmul.f32.gmra.mxu0 %v1057
        %v1079 = vpop.f32.mrf.mxu0
        %v1080 = vadd.f32 0.0, %v1079
        %1081 = vmatmul.f32.gmra.mxu0 %v1060
        %v1082 = vpop.f32.mrf.mxu0
        %v1083 = vadd.f32 0.0, %v1082
        %1084 = vdwg.mxu0
        %v1086 = vsel %vm614, %v1054, 0
        %v1089 = vsel %vm614, %v1055, 0
        %1091 = vmatpush.msra.mxu0 0.0
        %1092 = vmatpush.msra.mxu0 0.0
        %1093 = vmatpush.msra.mxu0 0.0
        %1094 = vmatpush.msra.mxu0 0.0
        %1095 = vmatpush.msra.mxu0 0.0
        %1096 = vmatpush.msra.mxu0 0.0
        %1097 = vmatpush.msra.mxu0 0.0
        %1098 = vmatpush.msra.mxu0 0.0
        %1099 = vmatpush.msra.mxu0 0.0
        %1100 = vmatpush.msra.mxu0 0.0
        %1101 = vmatpush.msra.mxu0 0.0
        %1102 = vmatpush.msra.mxu0 0.0
        %1103 = vmatpush.msra.mxu0 0.0
        %1104 = vmatpush.msra.mxu0 0.0
        %1105 = vmatpush.msra.mxu0 %v884
        %1106 = vmatpush.msra.mxu0 %v881
        %1107 = vmatmul.f32.gmra.mxu0 %v1086
        %v1108 = vpop.f32.mrf.mxu0
        %v1109 = vadd.f32 0.0, %v1108
        %1110 = vmatmul.f32.gmra.mxu0 %v1089
        %v1111 = vpop.f32.mrf.mxu0
        %v1112 = vadd.f32 0.0, %v1111
        %1113 = vdwg.mxu0
        %s1114 = scalar_lea.vmem %s1, 64
        %v1115 = vld [vmem:[%s1114] sm:$0xff]
        %v1116 = vld [vmem:[%s1114 + $0x8] sm:$0xff]
        %v1117 = vld [vmem:[%s1114 + $0x10] sm:$0xff]
        %v1118 = vld [vmem:[%s1114 + $0x18] sm:$0xff]
        %s1119 = scalar_lea.vmem %s2, 2
        %v1120 = vld [vmem:[%s1119] sm:$0x1]
        %v1122 = vperm.slane %v1120, 0
        %1124 = vmatpush.msra.mxu0 0.0
        %1125 = vmatpush.msra.mxu0 0.0
        %1126 = vmatpush.msra.mxu0 0.0
        %1127 = vmatpush.msra.mxu0 0.0
        %1128 = vmatpush.msra.mxu0 0.0
        %1129 = vmatpush.msra.mxu0 0.0
        %1130 = vmatpush.msra.mxu0 0.0
        %1131 = vmatpush.msra.mxu0 0.0
        %1132 = vmatpush.msra.mxu0 0.0
        %1133 = vmatpush.msra.mxu0 0.0
        %1134 = vmatpush.msra.mxu0 0.0
        %1135 = vmatpush.msra.mxu0 0.0
        %1136 = vmatpush.msra.mxu0 %v1118
        %1137 = vmatpush.msra.mxu0 %v1117
        %1138 = vmatpush.msra.mxu0 %v1116
        %1139 = vmatpush.msra.mxu0 %v1115
        %1140 = vmatmul.f32.gmra.mxu0 %v425
        %v1141 = vpop.f32.mrf.mxu0
        %v1142 = vadd.f32 %v1122, %v1141
        %1143 = vmatmul.f32.gmra.mxu0 %v428
        %v1144 = vpop.f32.mrf.mxu0
        %v1145 = vadd.f32 %v1122, %v1144
        %1146 = vmatmul.f32.gmra.mxu0 %v431
        %v1147 = vpop.f32.mrf.mxu0
        %v1148 = vadd.f32 %v1122, %v1147
        %1149 = vmatmul.f32.gmra.mxu0 %v434
        %v1150 = vpop.f32.mrf.mxu0
        %v1151 = vadd.f32 %v1122, %v1150
        %1152 = vdwg.mxu0
        %s1153 = scalar_lea.vmem %s3, 64
        %v1154 = vld [vmem:[%s1153] sm:$0xff]
        %v1155 = vld [vmem:[%s1153 + $0x8] sm:$0xff]
        %v1156 = vld [vmem:[%s1153 + $0x10] sm:$0xff]
        %v1157 = vld [vmem:[%s1153 + $0x18] sm:$0xff]
        %s1158 = scalar_lea.vmem %s4, 2
        %v1159 = vld [vmem:[%s1158] sm:$0x1]
        %v1161 = vperm.slane %v1159, 0
        %1163 = vmatpush.msra.mxu0 0.0
        %1164 = vmatpush.msra.mxu0 0.0
        %1165 = vmatpush.msra.mxu0 0.0
        %1166 = vmatpush.msra.mxu0 0.0
        %1167 = vmatpush.msra.mxu0 0.0
        %1168 = vmatpush.msra.mxu0 0.0
        %1169 = vmatpush.msra.mxu0 0.0
        %1170 = vmatpush.msra.mxu0 0.0
        %1171 = vmatpush.msra.mxu0 0.0
        %1172 = vmatpush.msra.mxu0 0.0
        %1173 = vmatpush.msra.mxu0 0.0
        %1174 = vmatpush.msra.mxu0 0.0
        %1175 = vmatpush.msra.mxu0 %v1157
        %1176 = vmatpush.msra.mxu0 %v1156
        %1177 = vmatpush.msra.mxu0 %v1155
        %1178 = vmatpush.msra.mxu0 %v1154
        %1179 = vmatmul.f32.gmra.mxu0 %v425
        %v1180 = vpop.f32.mrf.mxu0
        %v1181 = vadd.f32 %v1161, %v1180
        %1182 = vmatmul.f32.gmra.mxu0 %v428
        %v1183 = vpop.f32.mrf.mxu0
        %v1184 = vadd.f32 %v1161, %v1183
        %1185 = vmatmul.f32.gmra.mxu0 %v431
        %v1186 = vpop.f32.mrf.mxu0
        %v1187 = vadd.f32 %v1161, %v1186
        %1188 = vmatmul.f32.gmra.mxu0 %v434
        %v1189 = vpop.f32.mrf.mxu0
        %v1190 = vadd.f32 %v1161, %v1189
        %1191 = vdwg.mxu0
        %s1192 = scalar_lea.vmem %s5, 64
        %v1193 = vld [vmem:[%s1192] sm:$0xff]
        %v1194 = vld [vmem:[%s1192 + $0x8] sm:$0xff]
        %v1195 = vld [vmem:[%s1192 + $0x10] sm:$0xff]
        %v1196 = vld [vmem:[%s1192 + $0x18] sm:$0xff]
        %s1197 = scalar_lea.vmem %s6, 2
        %v1198 = vld [vmem:[%s1197] sm:$0x1]
        %v1200 = vperm.slane %v1198, 0
        %1202 = vmatpush.msra.mxu0 0.0
        %1203 = vmatpush.msra.mxu0 0.0
        %1204 = vmatpush.msra.mxu0 0.0
        %1205 = vmatpush.msra.mxu0 0.0
        %1206 = vmatpush.msra.mxu0 0.0
        %1207 = vmatpush.msra.mxu0 0.0
        %1208 = vmatpush.msra.mxu0 0.0
        %1209 = vmatpush.msra.mxu0 0.0
        %1210 = vmatpush.msra.mxu0 0.0
        %1211 = vmatpush.msra.mxu0 0.0
        %1212 = vmatpush.msra.mxu0 0.0
        %1213 = vmatpush.msra.mxu0 0.0
        %1214 = vmatpush.msra.mxu0 %v1196
        %1215 = vmatpush.msra.mxu0 %v1195
        %1216 = vmatpush.msra.mxu0 %v1194
        %1217 = vmatpush.msra.mxu0 %v1193
        %1218 = vmatmul.f32.gmra.mxu0 %v425
        %v1219 = vpop.f32.mrf.mxu0
        %v1220 = vadd.f32 %v1200, %v1219
        %1221 = vmatmul.f32.gmra.mxu0 %v428
        %v1222 = vpop.f32.mrf.mxu0
        %v1223 = vadd.f32 %v1200, %v1222
        %1224 = vmatmul.f32.gmra.mxu0 %v431
        %v1225 = vpop.f32.mrf.mxu0
        %v1226 = vadd.f32 %v1200, %v1225
        %1227 = vmatmul.f32.gmra.mxu0 %v434
        %v1228 = vpop.f32.mrf.mxu0
        %v1229 = vadd.f32 %v1200, %v1228
        %1230 = vdwg.mxu0
        %v1232 = vsel %vm539, %v1142, 0
        %v1235 = vsel %vm539, %v1145, 0
        %v1238 = vsel %vm539, %v1181, 0
        %v1241 = vsel %vm539, %v1184, 0
        %1243 = vmatpush.xpose.msra.mxu0 0.0
        %1244 = vmatpush.xpose.msra.mxu0 0.0
        %1245 = vmatpush.xpose.msra.mxu0 0.0
        %1246 = vmatpush.xpose.msra.mxu0 0.0
        %1247 = vmatpush.xpose.msra.mxu0 0.0
        %1248 = vmatpush.xpose.msra.mxu0 0.0
        %1249 = vmatpush.xpose.msra.mxu0 0.0
        %1250 = vmatpush.xpose.msra.mxu0 0.0
        %1251 = vmatpush.xpose.msra.mxu0 0.0
        %1252 = vmatpush.xpose.msra.mxu0 0.0
        %1253 = vmatpush.xpose.msra.mxu0 0.0
        %1254 = vmatpush.xpose.msra.mxu0 0.0
        %1255 = vmatpush.xpose.msra.mxu0 0.0
        %1256 = vmatpush.xpose.msra.mxu0 0.0
        %1257 = vmatpush.xpose.msra.mxu0 %v1241
        %1258 = vmatpush.xpose.msra.mxu0 %v1238
        %1259 = vmatmul.f32.gmra.mxu0 %v1232
        %v1260 = vpop.f32.mrf.mxu0
        %v1261 = vadd.f32 %v413, %v1260
        %1262 = vmatmul.f32.gmra.mxu0 %v1235
        %v1263 = vpop.f32.mrf.mxu0
        %v1264 = vadd.f32 %v414, %v1263
        %1265 = vdwg.mxu0
        %v1267 = vsel %vm539, %v1148, 0
        %v1270 = vsel %vm539, %v1151, 0
        %v1273 = vsel %vm539, %v1187, 0
        %v1276 = vsel %vm539, %v1190, 0
        %1278 = vmatpush.xpose.msra.mxu0 0.0
        %1279 = vmatpush.xpose.msra.mxu0 0.0
        %1280 = vmatpush.xpose.msra.mxu0 0.0
        %1281 = vmatpush.xpose.msra.mxu0 0.0
        %1282 = vmatpush.xpose.msra.mxu0 0.0
        %1283 = vmatpush.xpose.msra.mxu0 0.0
        %1284 = vmatpush.xpose.msra.mxu0 0.0
        %1285 = vmatpush.xpose.msra.mxu0 0.0
        %1286 = vmatpush.xpose.msra.mxu0 0.0
        %1287 = vmatpush.xpose.msra.mxu0 0.0
        %1288 = vmatpush.xpose.msra.mxu0 0.0
        %1289 = vmatpush.xpose.msra.mxu0 0.0
        %1290 = vmatpush.xpose.msra.mxu0 0.0
        %1291 = vmatpush.xpose.msra.mxu0 0.0
        %1292 = vmatpush.xpose.msra.mxu0 %v1276
        %1293 = vmatpush.xpose.msra.mxu0 %v1273
        %1294 = vmatmul.f32.gmra.mxu0 %v1267
        %v1295 = vpop.f32.mrf.mxu0
        %v1296 = vadd.f32 %v413, %v1295
        %1297 = vmatmul.f32.gmra.mxu0 %v1270
        %v1298 = vpop.f32.mrf.mxu0
        %v1299 = vadd.f32 %v414, %v1298
        %1300 = vdwg.mxu0
        %v1301 = vsel %vm409, -1e+10, %v1261
        %v1302 = vsel %vm410, -1e+10, %v1264
        %v1303 = vsel %vm411, -1e+10, %v1296
        %v1304 = vsel %vm412, -1e+10, %v1299
        %v1305 = vsel %vm614, %v1301, -inf
        %1306 = vmax.xlane.f32.xlu0 %v1305
        %v1307 = vpop.xlane.xlu0 %1306
        %v1308 = vsel %vm614, %v1302, -inf
        %1309 = vmax.xlane.f32.xlu0 %v1308
        %v1310 = vpop.xlane.xlu0 %1309
        %v1311 = vsel %vm614, %v1303, -inf
        %1312 = vmax.xlane.f32.xlu0 %v1311
        %v1313 = vpop.xlane.xlu0 %1312
        %v1314 = vsel %vm614, %v1304, -inf
        %1315 = vmax.xlane.f32.xlu0 %v1314
        %v1316 = vpop.xlane.xlu0 %1315
        %v1317 = vsub.f32 %v1301, %v1307
        %v1318 = vsub.f32 %v1302, %v1310
        %v1319 = vsub.f32 %v1303, %v1313
        %v1320 = vsub.f32 %v1304, %v1316
        %v1321 = vmul.f32 %v1317, 1.442695
        %v1322 = vpow.pop %v1321
        %v1323 = vmul.f32 %v1318, 1.442695
        %v1324 = vpow.pop %v1323
        %v1325 = vmul.f32 %v1319, 1.442695
        %v1326 = vpow.pop %v1325
        %v1327 = vmul.f32 %v1320, 1.442695
        %v1328 = vpow.pop %v1327
        %v1329 = vsel %vm614, %v1322, 0.0
        %1330 = vadd.xlane.f32.xlu0 %v1329
        %v1331 = vpop.xlane.xlu0 %1330
        %v1332 = vsel %vm614, %v1324, 0.0
        %1333 = vadd.xlane.f32.xlu0 %v1332
        %v1334 = vpop.xlane.xlu0 %1333
        %v1335 = vsel %vm614, %v1326, 0.0
        %1336 = vadd.xlane.f32.xlu0 %v1335
        %v1337 = vpop.xlane.xlu0 %1336
        %v1338 = vsel %vm614, %v1328, 0.0
        %1339 = vadd.xlane.f32.xlu0 %v1338
        %v1340 = vpop.xlane.xlu0 %1339
        %v1341 = vrcp.pop %v1331
        %v1342 = vmul.f32 %v1331, %v1341
        %v1343 = vsub.f32 1.0, %v1342
        %v1344 = vmul.f32 %v1341, %v1343
        %v1345 = vadd.f32 %v1341, %v1344
        %vm1346 = vweird.f32 %v1331
        %vm1347 = vweird.f32 %v1341
        %vm1348 = vmor %vm1346, %vm1347
        %v1349 = vsel %vm1348, %v1341, %v1345
        %v1350 = vand.u32 2147483647, %v1331
        %vm1351 = vcmp.eq.f32.partialorder %v1350, 8.507059e+37
        %v1352 = vand.u32 %v1331, 2147483648
        %v1353 = vor.u32 1.1754944e-38, %v1352
        %v1354 = vsel %vm1351, %v1353, %v1349
        %v1355 = vrcp.pop %v1334
        %v1356 = vmul.f32 %v1334, %v1355
        %v1357 = vsub.f32 1.0, %v1356
        %v1358 = vmul.f32 %v1355, %v1357
        %v1359 = vadd.f32 %v1355, %v1358
        %vm1360 = vweird.f32 %v1334
        %vm1361 = vweird.f32 %v1355
        %vm1362 = vmor %vm1360, %vm1361
        %v1363 = vsel %vm1362, %v1355, %v1359
        %v1364 = vand.u32 2147483647, %v1334
        %vm1365 = vcmp.eq.f32.partialorder %v1364, 8.507059e+37
        %v1366 = vand.u32 %v1334, 2147483648
        %v1367 = vor.u32 1.1754944e-38, %v1366
        %v1368 = vsel %vm1365, %v1367, %v1363
        %v1369 = vrcp.pop %v1337
        %v1370 = vmul.f32 %v1337, %v1369
        %v1371 = vsub.f32 1.0, %v1370
        %v1372 = vmul.f32 %v1369, %v1371
        %v1373 = vadd.f32 %v1369, %v1372
        %vm1374 = vweird.f32 %v1337
        %vm1375 = vweird.f32 %v1369
        %vm1376 = vmor %vm1374, %vm1375
        %v1377 = vsel %vm1376, %v1369, %v1373
        %v1378 = vand.u32 2147483647, %v1337
        %vm1379 = vcmp.eq.f32.partialorder %v1378, 8.507059e+37
        %v1380 = vand.u32 %v1337, 2147483648
        %v1381 = vor.u32 1.1754944e-38, %v1380
        %v1382 = vsel %vm1379, %v1381, %v1377
        %v1383 = vrcp.pop %v1340
        %v1384 = vmul.f32 %v1340, %v1383
        %v1385 = vsub.f32 1.0, %v1384
        %v1386 = vmul.f32 %v1383, %v1385
        %v1387 = vadd.f32 %v1383, %v1386
        %vm1388 = vweird.f32 %v1340
        %vm1389 = vweird.f32 %v1383
        %vm1390 = vmor %vm1388, %vm1389
        %v1391 = vsel %vm1390, %v1383, %v1387
        %v1392 = vand.u32 2147483647, %v1340
        %vm1393 = vcmp.eq.f32.partialorder %v1392, 8.507059e+37
        %v1394 = vand.u32 %v1340, 2147483648
        %v1395 = vor.u32 1.1754944e-38, %v1394
        %v1396 = vsel %vm1393, %v1395, %v1391
        %v1397 = vmul.f32 %v1322, %v1354
        %v1398 = vmul.f32 %v1324, %v1368
        %v1399 = vmul.f32 %v1326, %v1382
        %v1400 = vmul.f32 %v1328, %v1396
        %v1402 = vsel %vm614, %v1397, 0
        %v1405 = vsel %vm614, %v1398, 0
        %1407 = vmatpush.msra.mxu0 0.0
        %1408 = vmatpush.msra.mxu0 0.0
        %1409 = vmatpush.msra.mxu0 0.0
        %1410 = vmatpush.msra.mxu0 0.0
        %1411 = vmatpush.msra.mxu0 0.0
        %1412 = vmatpush.msra.mxu0 0.0
        %1413 = vmatpush.msra.mxu0 0.0
        %1414 = vmatpush.msra.mxu0 0.0
        %1415 = vmatpush.msra.mxu0 0.0
        %1416 = vmatpush.msra.mxu0 0.0
        %1417 = vmatpush.msra.mxu0 0.0
        %1418 = vmatpush.msra.mxu0 0.0
        %1419 = vmatpush.msra.mxu0 0.0
        %1420 = vmatpush.msra.mxu0 0.0
        %1421 = vmatpush.msra.mxu0 %v1223
        %1422 = vmatpush.msra.mxu0 %v1220
        %1423 = vmatmul.f32.gmra.mxu0 %v1402
        %v1424 = vpop.f32.mrf.mxu0
        %v1425 = vadd.f32 0.0, %v1424
        %1426 = vmatmul.f32.gmra.mxu0 %v1405
        %v1427 = vpop.f32.mrf.mxu0
        %v1428 = vadd.f32 0.0, %v1427
        %1429 = vdwg.mxu0
        %v1431 = vsel %vm614, %v1399, 0
        %v1434 = vsel %vm614, %v1400, 0
        %1436 = vmatpush.msra.mxu0 0.0
        %1437 = vmatpush.msra.mxu0 0.0
        %1438 = vmatpush.msra.mxu0 0.0
        %1439 = vmatpush.msra.mxu0 0.0
        %1440 = vmatpush.msra.mxu0 0.0
        %1441 = vmatpush.msra.mxu0 0.0
        %1442 = vmatpush.msra.mxu0 0.0
        %1443 = vmatpush.msra.mxu0 0.0
        %1444 = vmatpush.msra.mxu0 0.0
        %1445 = vmatpush.msra.mxu0 0.0
        %1446 = vmatpush.msra.mxu0 0.0
        %1447 = vmatpush.msra.mxu0 0.0
        %1448 = vmatpush.msra.mxu0 0.0
        %1449 = vmatpush.msra.mxu0 0.0
        %1450 = vmatpush.msra.mxu0 %v1229
        %1451 = vmatpush.msra.mxu0 %v1226
        %1452 = vmatmul.f32.gmra.mxu0 %v1431
        %v1453 = vpop.f32.mrf.mxu0
        %v1454 = vadd.f32 0.0, %v1453
        %1455 = vmatmul.f32.gmra.mxu0 %v1434
        %v1456 = vpop.f32.mrf.mxu0
        %v1457 = vadd.f32 0.0, %v1456
        %1458 = vdwg.mxu0
        %s1459 = scalar_lea.vmem %s1, 96
        %v1460 = vld [vmem:[%s1459] sm:$0xff]
        %v1461 = vld [vmem:[%s1459 + $0x8] sm:$0xff]
        %v1462 = vld [vmem:[%s1459 + $0x10] sm:$0xff]
        %v1463 = vld [vmem:[%s1459 + $0x18] sm:$0xff]
        %s1464 = scalar_lea.vmem %s2, 3
        %v1465 = vld [vmem:[%s1464] sm:$0x1]
        %v1467 = vperm.slane %v1465, 0
        %1469 = vmatpush.msra.mxu0 0.0
        %1470 = vmatpush.msra.mxu0 0.0
        %1471 = vmatpush.msra.mxu0 0.0
        %1472 = vmatpush.msra.mxu0 0.0
        %1473 = vmatpush.msra.mxu0 0.0
        %1474 = vmatpush.msra.mxu0 0.0
        %1475 = vmatpush.msra.mxu0 0.0
        %1476 = vmatpush.msra.mxu0 0.0
        %1477 = vmatpush.msra.mxu0 0.0
        %1478 = vmatpush.msra.mxu0 0.0
        %1479 = vmatpush.msra.mxu0 0.0
        %1480 = vmatpush.msra.mxu0 0.0
        %1481 = vmatpush.msra.mxu0 %v1463
        %1482 = vmatpush.msra.mxu0 %v1462
        %1483 = vmatpush.msra.mxu0 %v1461
        %1484 = vmatpush.msra.mxu0 %v1460
        %1485 = vmatmul.f32.gmra.mxu0 %v425
        %v1486 = vpop.f32.mrf.mxu0
        %v1487 = vadd.f32 %v1467, %v1486
        %1488 = vmatmul.f32.gmra.mxu0 %v428
        %v1489 = vpop.f32.mrf.mxu0
        %v1490 = vadd.f32 %v1467, %v1489
        %1491 = vmatmul.f32.gmra.mxu0 %v431
        %v1492 = vpop.f32.mrf.mxu0
        %v1493 = vadd.f32 %v1467, %v1492
        %1494 = vmatmul.f32.gmra.mxu0 %v434
        %v1495 = vpop.f32.mrf.mxu0
        %v1496 = vadd.f32 %v1467, %v1495
        %1497 = vdwg.mxu0
        %s1498 = scalar_lea.vmem %s3, 96
        %v1499 = vld [vmem:[%s1498] sm:$0xff]
        %v1500 = vld [vmem:[%s1498 + $0x8] sm:$0xff]
        %v1501 = vld [vmem:[%s1498 + $0x10] sm:$0xff]
        %v1502 = vld [vmem:[%s1498 + $0x18] sm:$0xff]
        %s1503 = scalar_lea.vmem %s4, 3
        %v1504 = vld [vmem:[%s1503] sm:$0x1]
        %v1506 = vperm.slane %v1504, 0
        %1508 = vmatpush.msra.mxu0 0.0
        %1509 = vmatpush.msra.mxu0 0.0
        %1510 = vmatpush.msra.mxu0 0.0
        %1511 = vmatpush.msra.mxu0 0.0
        %1512 = vmatpush.msra.mxu0 0.0
        %1513 = vmatpush.msra.mxu0 0.0
        %1514 = vmatpush.msra.mxu0 0.0
        %1515 = vmatpush.msra.mxu0 0.0
        %1516 = vmatpush.msra.mxu0 0.0
        %1517 = vmatpush.msra.mxu0 0.0
        %1518 = vmatpush.msra.mxu0 0.0
        %1519 = vmatpush.msra.mxu0 0.0
        %1520 = vmatpush.msra.mxu0 %v1502
        %1521 = vmatpush.msra.mxu0 %v1501
        %1522 = vmatpush.msra.mxu0 %v1500
        %1523 = vmatpush.msra.mxu0 %v1499
        %1524 = vmatmul.f32.gmra.mxu0 %v425
        %v1525 = vpop.f32.mrf.mxu0
        %v1526 = vadd.f32 %v1506, %v1525
        %1527 = vmatmul.f32.gmra.mxu0 %v428
        %v1528 = vpop.f32.mrf.mxu0
        %v1529 = vadd.f32 %v1506, %v1528
        %1530 = vmatmul.f32.gmra.mxu0 %v431
        %v1531 = vpop.f32.mrf.mxu0
        %v1532 = vadd.f32 %v1506, %v1531
        %1533 = vmatmul.f32.gmra.mxu0 %v434
        %v1534 = vpop.f32.mrf.mxu0
        %v1535 = vadd.f32 %v1506, %v1534
        %1536 = vdwg.mxu0
        %s1537 = scalar_lea.vmem %s5, 96
        %v1538 = vld [vmem:[%s1537] sm:$0xff]
        %v1539 = vld [vmem:[%s1537 + $0x8] sm:$0xff]
        %v1540 = vld [vmem:[%s1537 + $0x10] sm:$0xff]
        %v1541 = vld [vmem:[%s1537 + $0x18] sm:$0xff]
        %s1542 = scalar_lea.vmem %s6, 3
        %v1543 = vld [vmem:[%s1542] sm:$0x1]
        %v1545 = vperm.slane %v1543, 0
        %1547 = vmatpush.msra.mxu0 0.0
        %1548 = vmatpush.msra.mxu0 0.0
        %1549 = vmatpush.msra.mxu0 0.0
        %1550 = vmatpush.msra.mxu0 0.0
        %1551 = vmatpush.msra.mxu0 0.0
        %1552 = vmatpush.msra.mxu0 0.0
        %1553 = vmatpush.msra.mxu0 0.0
        %1554 = vmatpush.msra.mxu0 0.0
        %1555 = vmatpush.msra.mxu0 0.0
        %1556 = vmatpush.msra.mxu0 0.0
        %1557 = vmatpush.msra.mxu0 0.0
        %1558 = vmatpush.msra.mxu0 0.0
        %1559 = vmatpush.msra.mxu0 %v1541
        %1560 = vmatpush.msra.mxu0 %v1540
        %1561 = vmatpush.msra.mxu0 %v1539
        %1562 = vmatpush.msra.mxu0 %v1538
        %1563 = vmatmul.f32.gmra.mxu0 %v425
        %v1564 = vpop.f32.mrf.mxu0
        %v1565 = vadd.f32 %v1545, %v1564
        %1566 = vmatmul.f32.gmra.mxu0 %v428
        %v1567 = vpop.f32.mrf.mxu0
        %v1568 = vadd.f32 %v1545, %v1567
        %1569 = vmatmul.f32.gmra.mxu0 %v431
        %v1570 = vpop.f32.mrf.mxu0
        %v1571 = vadd.f32 %v1545, %v1570
        %1572 = vmatmul.f32.gmra.mxu0 %v434
        %v1573 = vpop.f32.mrf.mxu0
        %v1574 = vadd.f32 %v1545, %v1573
        %1575 = vdwg.mxu0
        %v1577 = vsel %vm539, %v1487, 0
        %v1580 = vsel %vm539, %v1490, 0
        %v1583 = vsel %vm539, %v1526, 0
        %v1586 = vsel %vm539, %v1529, 0
        %1588 = vmatpush.xpose.msra.mxu0 0.0
        %1589 = vmatpush.xpose.msra.mxu0 0.0
        %1590 = vmatpush.xpose.msra.mxu0 0.0
        %1591 = vmatpush.xpose.msra.mxu0 0.0
        %1592 = vmatpush.xpose.msra.mxu0 0.0
        %1593 = vmatpush.xpose.msra.mxu0 0.0
        %1594 = vmatpush.xpose.msra.mxu0 0.0
        %1595 = vmatpush.xpose.msra.mxu0 0.0
        %1596 = vmatpush.xpose.msra.mxu0 0.0
        %1597 = vmatpush.xpose.msra.mxu0 0.0
        %1598 = vmatpush.xpose.msra.mxu0 0.0
        %1599 = vmatpush.xpose.msra.mxu0 0.0
        %1600 = vmatpush.xpose.msra.mxu0 0.0
        %1601 = vmatpush.xpose.msra.mxu0 0.0
        %1602 = vmatpush.xpose.msra.mxu0 %v1586
        %1603 = vmatpush.xpose.msra.mxu0 %v1583
        %1604 = vmatmul.f32.gmra.mxu0 %v1577
        %v1605 = vpop.f32.mrf.mxu0
        %v1606 = vadd.f32 %v413, %v1605
        %1607 = vmatmul.f32.gmra.mxu0 %v1580
        %v1608 = vpop.f32.mrf.mxu0
        %v1609 = vadd.f32 %v414, %v1608
        %1610 = vdwg.mxu0
        %v1612 = vsel %vm539, %v1493, 0
        %v1615 = vsel %vm539, %v1496, 0
        %v1618 = vsel %vm539, %v1532, 0
        %v1621 = vsel %vm539, %v1535, 0
        %1623 = vmatpush.xpose.msra.mxu0 0.0
        %1624 = vmatpush.xpose.msra.mxu0 0.0
        %1625 = vmatpush.xpose.msra.mxu0 0.0
        %1626 = vmatpush.xpose.msra.mxu0 0.0
        %1627 = vmatpush.xpose.msra.mxu0 0.0
        %1628 = vmatpush.xpose.msra.mxu0 0.0
        %1629 = vmatpush.xpose.msra.mxu0 0.0
        %1630 = vmatpush.xpose.msra.mxu0 0.0
        %1631 = vmatpush.xpose.msra.mxu0 0.0
        %1632 = vmatpush.xpose.msra.mxu0 0.0
        %1633 = vmatpush.xpose.msra.mxu0 0.0
        %1634 = vmatpush.xpose.msra.mxu0 0.0
        %1635 = vmatpush.xpose.msra.mxu0 0.0
        %1636 = vmatpush.xpose.msra.mxu0 0.0
        %1637 = vmatpush.xpose.msra.mxu0 %v1621
        %1638 = vmatpush.xpose.msra.mxu0 %v1618
        %1639 = vmatmul.f32.gmra.mxu0 %v1612
        %v1640 = vpop.f32.mrf.mxu0
        %v1641 = vadd.f32 %v413, %v1640
        %1642 = vmatmul.f32.gmra.mxu0 %v1615
        %v1643 = vpop.f32.mrf.mxu0
        %v1644 = vadd.f32 %v414, %v1643
        %1645 = vdwg.mxu0
        %v1646 = vsel %vm409, -1e+10, %v1606
        %v1647 = vsel %vm410, -1e+10, %v1609
        %v1648 = vsel %vm411, -1e+10, %v1641
        %v1649 = vsel %vm412, -1e+10, %v1644
        %v1650 = vsel %vm614, %v1646, -inf
        %1651 = vmax.xlane.f32.xlu0 %v1650
        %v1652 = vpop.xlane.xlu0 %1651
        %v1653 = vsel %vm614, %v1647, -inf
        %1654 = vmax.xlane.f32.xlu0 %v1653
        %v1655 = vpop.xlane.xlu0 %1654
        %v1656 = vsel %vm614, %v1648, -inf
        %1657 = vmax.xlane.f32.xlu0 %v1656
        %v1658 = vpop.xlane.xlu0 %1657
        %v1659 = vsel %vm614, %v1649, -inf
        %1660 = vmax.xlane.f32.xlu0 %v1659
        %v1661 = vpop.xlane.xlu0 %1660
        %v1662 = vsub.f32 %v1646, %v1652
        %v1663 = vsub.f32 %v1647, %v1655
        %v1664 = vsub.f32 %v1648, %v1658
        %v1665 = vsub.f32 %v1649, %v1661
        %v1666 = vmul.f32 %v1662, 1.442695
        %v1667 = vpow.pop %v1666
        %v1668 = vmul.f32 %v1663, 1.442695
        %v1669 = vpow.pop %v1668
        %v1670 = vmul.f32 %v1664, 1.442695
        %v1671 = vpow.pop %v1670
        %v1672 = vmul.f32 %v1665, 1.442695
        %v1673 = vpow.pop %v1672
        %v1674 = vsel %vm614, %v1667, 0.0
        %1675 = vadd.xlane.f32.xlu0 %v1674
        %v1676 = vpop.xlane.xlu0 %1675
        %v1677 = vsel %vm614, %v1669, 0.0
        %1678 = vadd.xlane.f32.xlu0 %v1677
        %v1679 = vpop.xlane.xlu0 %1678
        %v1680 = vsel %vm614, %v1671, 0.0
        %1681 = vadd.xlane.f32.xlu0 %v1680
        %v1682 = vpop.xlane.xlu0 %1681
        %v1683 = vsel %vm614, %v1673, 0.0
        %1684 = vadd.xlane.f32.xlu0 %v1683
        %v1685 = vpop.xlane.xlu0 %1684
        %v1686 = vrcp.pop %v1676
        %v1687 = vmul.f32 %v1676, %v1686
        %v1688 = vsub.f32 1.0, %v1687
        %v1689 = vmul.f32 %v1686, %v1688
        %v1690 = vadd.f32 %v1686, %v1689
        %vm1691 = vweird.f32 %v1676
        %vm1692 = vweird.f32 %v1686
        %vm1693 = vmor %vm1691, %vm1692
        %v1694 = vsel %vm1693, %v1686, %v1690
        %v1695 = vand.u32 2147483647, %v1676
        %vm1696 = vcmp.eq.f32.partialorder %v1695, 8.507059e+37
        %v1697 = vand.u32 %v1676, 2147483648
        %v1698 = vor.u32 1.1754944e-38, %v1697
        %v1699 = vsel %vm1696, %v1698, %v1694
        %v1700 = vrcp.pop %v1679
        %v1701 = vmul.f32 %v1679, %v1700
        %v1702 = vsub.f32 1.0, %v1701
        %v1703 = vmul.f32 %v1700, %v1702
        %v1704 = vadd.f32 %v1700, %v1703
        %vm1705 = vweird.f32 %v1679
        %vm1706 = vweird.f32 %v1700
        %vm1707 = vmor %vm1705, %vm1706
        %v1708 = vsel %vm1707, %v1700, %v1704
        %v1709 = vand.u32 2147483647, %v1679
        %vm1710 = vcmp.eq.f32.partialorder %v1709, 8.507059e+37
        %v1711 = vand.u32 %v1679, 2147483648
        %v1712 = vor.u32 1.1754944e-38, %v1711
        %v1713 = vsel %vm1710, %v1712, %v1708
        %v1714 = vrcp.pop %v1682
        %v1715 = vmul.f32 %v1682, %v1714
        %v1716 = vsub.f32 1.0, %v1715
        %v1717 = vmul.f32 %v1714, %v1716
        %v1718 = vadd.f32 %v1714, %v1717
        %vm1719 = vweird.f32 %v1682
        %vm1720 = vweird.f32 %v1714
        %vm1721 = vmor %vm1719, %vm1720
        %v1722 = vsel %vm1721, %v1714, %v1718
        %v1723 = vand.u32 2147483647, %v1682
        %vm1724 = vcmp.eq.f32.partialorder %v1723, 8.507059e+37
        %v1725 = vand.u32 %v1682, 2147483648
        %v1726 = vor.u32 1.1754944e-38, %v1725
        %v1727 = vsel %vm1724, %v1726, %v1722
        %v1728 = vrcp.pop %v1685
        %v1729 = vmul.f32 %v1685, %v1728
        %v1730 = vsub.f32 1.0, %v1729
        %v1731 = vmul.f32 %v1728, %v1730
        %v1732 = vadd.f32 %v1728, %v1731
        %vm1733 = vweird.f32 %v1685
        %vm1734 = vweird.f32 %v1728
        %vm1735 = vmor %vm1733, %vm1734
        %v1736 = vsel %vm1735, %v1728, %v1732
        %v1737 = vand.u32 2147483647, %v1685
        %vm1738 = vcmp.eq.f32.partialorder %v1737, 8.507059e+37
        %v1739 = vand.u32 %v1685, 2147483648
        %v1740 = vor.u32 1.1754944e-38, %v1739
        %v1741 = vsel %vm1738, %v1740, %v1736
        %v1742 = vmul.f32 %v1667, %v1699
        %v1743 = vmul.f32 %v1669, %v1713
        %v1744 = vmul.f32 %v1671, %v1727
        %v1745 = vmul.f32 %v1673, %v1741
        %v1747 = vsel %vm614, %v1742, 0
        %v1750 = vsel %vm614, %v1743, 0
        %1752 = vmatpush.msra.mxu0 0.0
        %1753 = vmatpush.msra.mxu0 0.0
        %1754 = vmatpush.msra.mxu0 0.0
        %1755 = vmatpush.msra.mxu0 0.0
        %1756 = vmatpush.msra.mxu0 0.0
        %1757 = vmatpush.msra.mxu0 0.0
        %1758 = vmatpush.msra.mxu0 0.0
        %1759 = vmatpush.msra.mxu0 0.0
        %1760 = vmatpush.msra.mxu0 0.0
        %1761 = vmatpush.msra.mxu0 0.0
        %1762 = vmatpush.msra.mxu0 0.0
        %1763 = vmatpush.msra.mxu0 0.0
        %1764 = vmatpush.msra.mxu0 0.0
        %1765 = vmatpush.msra.mxu0 0.0
        %1766 = vmatpush.msra.mxu0 %v1568
        %1767 = vmatpush.msra.mxu0 %v1565
        %1768 = vmatmul.f32.gmra.mxu0 %v1747
        %v1769 = vpop.f32.mrf.mxu0
        %v1770 = vadd.f32 0.0, %v1769
        %1771 = vmatmul.f32.gmra.mxu0 %v1750
        %v1772 = vpop.f32.mrf.mxu0
        %v1773 = vadd.f32 0.0, %v1772
        %1774 = vdwg.mxu0
        %v1776 = vsel %vm614, %v1744, 0
        %v1779 = vsel %vm614, %v1745, 0
        %1781 = vmatpush.msra.mxu0 0.0
        %1782 = vmatpush.msra.mxu0 0.0
        %1783 = vmatpush.msra.mxu0 0.0
        %1784 = vmatpush.msra.mxu0 0.0
        %1785 = vmatpush.msra.mxu0 0.0
        %1786 = vmatpush.msra.mxu0 0.0
        %1787 = vmatpush.msra.mxu0 0.0
        %1788 = vmatpush.msra.mxu0 0.0
        %1789 = vmatpush.msra.mxu0 0.0
        %1790 = vmatpush.msra.mxu0 0.0
        %1791 = vmatpush.msra.mxu0 0.0
        %1792 = vmatpush.msra.mxu0 0.0
        %1793 = vmatpush.msra.mxu0 0.0
        %1794 = vmatpush.msra.mxu0 0.0
        %1795 = vmatpush.msra.mxu0 %v1574
        %1796 = vmatpush.msra.mxu0 %v1571
        %1797 = vmatmul.f32.gmra.mxu0 %v1776
        %v1798 = vpop.f32.mrf.mxu0
        %v1799 = vadd.f32 0.0, %v1798
        %1800 = vmatmul.f32.gmra.mxu0 %v1779
        %v1801 = vpop.f32.mrf.mxu0
        %v1802 = vadd.f32 0.0, %v1801
        %1803 = vdwg.mxu0
        %1808 = vrot.lane.b32.xlu0 %v1080, 8
        %v1809 = vpop.permute.xlu0 %1808
        %1810 = vrot.lane.b32.xlu0 %v1083, 8
        %v1811 = vpop.permute.xlu0 %1810
        %1812 = vrot.lane.b32.xlu0 %v1109, 8
        %v1813 = vpop.permute.xlu0 %1812
        %1814 = vrot.lane.b32.xlu0 %v1112, 8
        %v1815 = vpop.permute.xlu0 %1814
        %1824 = vrot.lane.b32.xlu0 %v1425, 16
        %v1825 = vpop.permute.xlu0 %1824
        %1826 = vrot.lane.b32.xlu0 %v1428, 16
        %v1827 = vpop.permute.xlu0 %1826
        %1828 = vrot.lane.b32.xlu0 %v1454, 16
        %v1829 = vpop.permute.xlu0 %1828
        %1830 = vrot.lane.b32.xlu0 %v1457, 16
        %v1831 = vpop.permute.xlu0 %1830
        %1840 = vrot.lane.b32.xlu0 %v1770, 24
        %v1841 = vpop.permute.xlu0 %1840
        %1842 = vrot.lane.b32.xlu0 %v1773, 24
        %v1843 = vpop.permute.xlu0 %1842
        %1844 = vrot.lane.b32.xlu0 %v1799, 24
        %v1845 = vpop.permute.xlu0 %1844
        %1846 = vrot.lane.b32.xlu0 %v1802, 24
        %v1847 = vpop.permute.xlu0 %1846
        %v1852 = vsel %vm539, %v735, %v1809
        %v1853 = vsel %vm539, %v738, %v1811
        %v1854 = vsel %vm539, %v764, %v1813
        %v1855 = vsel %vm539, %v767, %v1815
        %v1856 = vsel %vm614, %v1852, %v1825
        %v1857 = vsel %vm614, %v1853, %v1827
        %v1858 = vsel %vm614, %v1854, %v1829
        %v1859 = vsel %vm614, %v1855, %v1831
        %vm1860 = vcmask 195584
        %v1861 = vsel %vm1860, %v1856, %v1841
        %v1862 = vsel %vm1860, %v1857, %v1843
        %v1863 = vsel %vm1860, %v1858, %v1845
        %v1864 = vsel %vm1860, %v1859, %v1847
        %1865 = vst.msk [vmem:[%s377] sm:$0xff] %vm423, %v1861
        %1866 = vst.msk [vmem:[%s377 + $0x8] sm:$0xff] %vm423, %v1862
        %1867 = vst.msk [vmem:[%s377 + $0x10] sm:$0xff] %vm423, %v1863
        %1868 = vst.msk [vmem:[%s377 + $0x18] sm:$0xff] %vm423, %v1864
        %1869 = vst.msk [vmem:[%s384] sm:$0xff] %vm614, %v707
        %1870 = vst.msk [vmem:[%s384 + $0x8] sm:$0xff] %vm614, %v708
        %1871 = vst.msk [vmem:[%s384 + $0x10] sm:$0xff] %vm614, %v1052
        %1872 = vst.msk [vmem:[%s384 + $0x18] sm:$0xff] %vm614, %v1053
        %1873 = vst.msk [vmem:[%s384 + $0x20] sm:$0xff] %vm614, %v1397
        %1874 = vst.msk [vmem:[%s384 + $0x28] sm:$0xff] %vm614, %v1398
        %1875 = vst.msk [vmem:[%s384 + $0x30] sm:$0xff] %vm614, %v1742
        %1876 = vst.msk [vmem:[%s384 + $0x38] sm:$0xff] %vm614, %v1743
        %1877 = vst.msk [vmem:[%s384 + $0x40] sm:$0xff] %vm614, %v709
        %1878 = vst.msk [vmem:[%s384 + $0x48] sm:$0xff] %vm614, %v710
        %1879 = vst.msk [vmem:[%s384 + $0x50] sm:$0xff] %vm614, %v1054
        %1880 = vst.msk [vmem:[%s384 + $0x58] sm:$0xff] %vm614, %v1055
        %1881 = vst.msk [vmem:[%s384 + $0x60] sm:$0xff] %vm614, %v1399
        %1882 = vst.msk [vmem:[%s384 + $0x68] sm:$0xff] %vm614, %v1400
        %1883 = vst.msk [vmem:[%s384 + $0x70] sm:$0xff] %vm614, %v1744
        %1884 = vst.msk [vmem:[%s384 + $0x78] sm:$0xff] %vm614, %v1745
        %s1885 = sand.u32 %s235, 1
        %s1886 = scalar_lea.sflag [#allocation3], %s1885
        %s1887 = sand.u32 %s235, 1
        %s1888 = smul.addr %s1887, 32
        %s1889 = scalar_lea.vmem [#allocation2], %s1888
        %s1890 = sand.u32 %s261, 1
        %s1891 = scalar_lea.sflag [#allocation5], %s1890
        %s1892 = sand.u32 %s261, 1
        %s1893 = smul.addr %s1892, 128
        %s1894 = scalar_lea.vmem [#allocation4], %s1893
        // Predicated region
        $region57: #{tpu_custom_call.1} parent=55 // pred_check
          %p1895 = pneg %p245
        $region58: #{tpu_custom_call.1} parent=55 // pred_check_branch
          %1897 = sbr.rel (%p1895) target = $region60
        $region59: #{tpu_custom_call.1} parent=55 // pred_region
          %s1898 = smul.u32 2, %s28
          %1900 = vsyncadd %s1886, 0
          %s1901 = smul.addr %s1898, 2
          %s1902 = smul.addr %s1901, 8
          %s1903 = scalar_lea.hbm %s9, %s1902
          %s1904 = sshll.u32 %s1889, 4
          %s1905 = int_to_ptr.vmem [resolvable:$true] %s1904
          %s1906 = sshll.u32 %s1903, 4
          %s1907 = int_to_ptr.hbm [resolvable:$true] %s1906
          %1912 = dma.vmem_to_hbm [thread:$0]  %s1905, 512, %s1907, %s1886, 128, 128, 8
        $region60: #{tpu_custom_call.1} parent=55 // pred_fallthru
          _
        // Predicated region
        $region61: #{tpu_custom_call.1} parent=55 // pred_check
          %p1913 = pneg %p271
        $region62: #{tpu_custom_call.1} parent=55 // pred_check_branch
          %1915 = sbr.rel (%p1913) target = $region64
        $region63: #{tpu_custom_call.1} parent=55 // pred_region
          %s1916 = smul.u32 2, %s28
          %1918 = vsyncadd %s1891, 0
          %s1919 = smul.addr %s1916, 8
          %s1920 = smul.addr %s1919, 8
          %s1921 = scalar_lea.hbm %s10, %s1920
          %s1922 = sshll.u32 %s1894, 4
          %s1923 = int_to_ptr.vmem [resolvable:$true] %s1922
          %s1924 = sshll.u32 %s1921, 4
          %s1925 = int_to_ptr.hbm [resolvable:$true] %s1924
          %1930 = dma.vmem_to_hbm [thread:$0]  %s1923, 2048, %s1925, %s1891, 128, 128, 8
        $region64: #{tpu_custom_call.1} parent=55 // pred_fallthru
          _
      $region56: #{tpu_custom_call.1} parent=5 // pred_fallthru
        _
      %p1931 = scmp.le.s32.totalorder 2, %s23
      // Predicated region
      $region65: #{tpu_custom_call.1} parent=5 // pred_check
        %p1932 = pneg %p1931
      $region66: #{tpu_custom_call.1} parent=5 // pred_check_branch
        %1934 = sbr.rel (%p1932) target = $region68
      $region67: #{tpu_custom_call.1} parent=5 // pred_region
        %s1935 = ssub.s32 %s23, 2
        // Predicated region
        $region69: #{tpu_custom_call.1} parent=67 // pred_check
          %p1936 = pneg %p251
        $region70: #{tpu_custom_call.1} parent=67 // pred_check_branch
          %1938 = sbr.rel (%p1936) target = $region72
        $region71: #{tpu_custom_call.1} parent=67 // pred_region
          %s1939 = sand.u32 %s236, 1
          %s1940 = scalar_lea.sflag [#allocation3], %s1939
          %s1941 = sand.u32 %s236, 1
          %s1942 = smul.addr %s1941, 32
          %s1943 = scalar_lea.vmem [#allocation2], %s1942
          %1945 = dma.done %s1940, 512
        $region72: #{tpu_custom_call.1} parent=67 // pred_fallthru
          _
        // Predicated region
        $region73: #{tpu_custom_call.1} parent=67 // pred_check
          %p1946 = pneg %p277
        $region74: #{tpu_custom_call.1} parent=67 // pred_check_branch
          %1948 = sbr.rel (%p1946) target = $region76
        $region75: #{tpu_custom_call.1} parent=67 // pred_region
          %s1949 = sand.u32 %s262, 1
          %s1950 = scalar_lea.sflag [#allocation5], %s1949
          %s1951 = sand.u32 %s262, 1
          %s1952 = smul.addr %s1951, 128
          %s1953 = scalar_lea.vmem [#allocation4], %s1952
          %1955 = dma.done %s1950, 2048
        $region76: #{tpu_custom_call.1} parent=67 // pred_fallthru
          _
      $region68: #{tpu_custom_call.1} parent=5 // pred_fallthru
        _
    $region6: #{tpu_custom_call.1} parent=1 // loop_footer
      %s27 = sadd.s32 1, %s23
    $region7: #{tpu_custom_call.1} parent=1 // loop_footer_branch
      %22 = sbr.rel target = $region3
    $region8: #{tpu_custom_call.1} parent=1 // loop_exit
      _
    %1956 = vsyncpa [#allocation3], 1
    %s1957 = scalar_lea.sflag [#allocation3], 1
    %1958 = vsyncpa %s1957, 1
    %1959 = vsyncpa [#allocation5], 1
    %s1960 = scalar_lea.sflag [#allocation5], 1
    %1961 = vsyncpa %s1960, 1

</llo_original>
